<compile_context>
chip_gen: v7x
topology: tpu7x:2x2x1
jax: 0.10.0
libtpu: 0.0.40
codegen_flags: <defaults>
</compile_context>

<pallas_src>
import functools

import jax
import jax.numpy as jnp
import numpy as np
from jax import lax
from jax.experimental import pallas as pl
from jax.experimental.pallas import tpu as pltpu


def _mha_kernel(x_ref, wq_ref, wk_ref, wv_ref, bq_ref, bk_ref, bv_ref,
                wo_ref, bo_ref, o_ref, *, d_k, g):
    gi = pl.program_id(1)                     # head-group index (trailing, "arbitrary")
    S = x_ref.shape[1]
    D = o_ref.shape[2]

    x = x_ref[0]                              # (S, D) bf16 (pre-cast on the host)

    # Grouped Q/K/V projections: one MXU pass each, N = g*d_k lanes,
    # f32 accumulation.  1/sqrt(d_k) is already folded into wq / bq.
    q = (jnp.dot(x, wq_ref[0], preferred_element_type=jnp.float32)
         + bq_ref[0]).astype(jnp.bfloat16)    # (S, g*d_k)
    k = (jnp.dot(x, wk_ref[0], preferred_element_type=jnp.float32)
         + bk_ref[0]).astype(jnp.bfloat16)    # (S, g*d_k)
    v = (jnp.dot(x, wv_ref[0], preferred_element_type=jnp.float32)
         + bv_ref[0]).astype(jnp.bfloat16)    # (S, g*d_k)

    # Per-head attention inside the group (g is small and static -> unrolled).
    o_parts = []
    for i in range(g):
        sl = slice(i * d_k, (i + 1) * d_k)
        # scores = q_i @ k_i^T via contraction of the last axes (no transpose).
        s = lax.dot_general(q[:, sl], k[:, sl],
                            dimension_numbers=(((1,), (1,)), ((), ())),
                            preferred_element_type=jnp.float32)          # (S, S) f32
        # Numerically-stable softmax, all element-wise math in f32 (v5e-safe);
        # the divide goes to the EUP via pl.reciprocal.
        s = s - jnp.max(s, axis=-1, keepdims=True)
        p = jnp.exp(s)
        p = p * pl.reciprocal(jnp.sum(p, axis=-1, keepdims=True), approx=True)
        o_parts.append(jnp.dot(p.astype(jnp.bfloat16), v[:, sl],
                               preferred_element_type=jnp.float32))       # (S, d_k) f32

    # Grouped output projection: single GEMM with contraction K = g*d_k,
    # instead of g tiny per-head GEMMs (and no head concat in HBM).
    o_g = jnp.concatenate(o_parts, axis=-1).astype(jnp.bfloat16)          # (S, g*d_k)
    contrib = jnp.dot(o_g, wo_ref[0], preferred_element_type=jnp.float32)  # (S, D) f32

    # Accumulate into the resident f32 output block.  Bias is added exactly
    # once (group 0); no scratch accumulator, no per-step full store+cast.
    @pl.when(gi == 0)
    def _init():
        o_ref[0] = jnp.broadcast_to(bo_ref[...], (S, D)).astype(o_ref.dtype)

    o_ref[0] += contrib.astype(o_ref.dtype)


def _default_group_size(h, d_k, target_lanes=512):
    """Largest divisor g of h with g*d_k <= target_lanes.

    Targets ~256-512 lanes per projection GEMM so the 256-wide MXUs on
    v6e/v7x are filled while the grouped weight blocks (plus double
    buffering) stay small; on v5e any multiple of 128 is already enough.
    """
    g = 1
    for cand in range(1, h + 1):
        if h % cand == 0 and cand * d_k <= target_lanes:
            g = cand
    return g


def _prep_params(params, *, d_k, d_model, g, n_groups):
    """Split PyTorch-convention weights into per-head-group, kernel-friendly slabs."""
    D = d_model
    G = g * d_k
    scale = 1.0 / np.sqrt(d_k)

    def split_w(w, s=1.0):                    # torch (out, in) -> (n_groups, D, G)
        return (w.T * s).reshape(D, n_groups, G).transpose(1, 0, 2)

    def split_b(b, s=1.0):                    # (D,) -> (n_groups, 1, G)
        return (b * s).reshape(n_groups, 1, G)

    # 1/sqrt(d_k) folded into the Q projection (weights + bias).
    w_q = split_w(params["wq"], scale).astype(jnp.bfloat16)
    w_k = split_w(params["wk"]).astype(jnp.bfloat16)
    w_v = split_w(params["wv"]).astype(jnp.bfloat16)
    b_q = split_b(params["bq"], scale).astype(jnp.float32)
    b_k = split_b(params["bk"]).astype(jnp.float32)
    b_v = split_b(params["bv"]).astype(jnp.float32)

    w_o = params["wo"].T.reshape(n_groups, G, D).astype(jnp.bfloat16)   # (n_groups, G, D)
    b_o = params["bo"].reshape(1, D).astype(jnp.float32)                # (1, D)
    return w_q, w_k, w_v, b_q, b_k, b_v, w_o, b_o


def multi_head_attention(x, params, *, h, group_size=None):
    """x: (B, S, D) float32. params: dict of PyTorch-convention weights/biases."""
    B, S, D = x.shape
    assert D % h == 0, "head number should divide d_model"
    d_k = D // h

    g = _default_group_size(h, d_k) if group_size is None else group_size
    assert h % g == 0, "group_size must divide the number of heads"
    n_groups = h // g
    G = g * d_k

    w_q, w_k, w_v, b_q, b_k, b_v, w_o, b_o = _prep_params(
        params, d_k=d_k, d_model=D, g=g, n_groups=n_groups)

    # x pre-cast to bf16: halves x DMA bytes and hoists the cast out of the
    # head-group loop.  Output stays f32 so the head accumulation is exact.
    x_bf = x.astype(jnp.bfloat16)

    kernel = functools.partial(_mha_kernel, d_k=d_k, g=g)

    flops = 8 * B * S * D * D + 4 * B * S * S * D
    # Weight/bias blocks change with the group index, so they are re-fetched
    # once per batch index (grid is b-outer, group-inner): count them B times.
    bytes_accessed = (
        x_bf.size * 2 + B * S * D * 4
        + B * (w_q.size + w_k.size + w_v.size + w_o.size) * 2
        + B * (b_q.size + b_k.size + b_v.size) * 4
        + b_o.size * 4)
    cost = pl.CostEstimate(flops=flops,
                           transcendentals=B * h * S * S,
                           bytes_accessed=int(bytes_accessed))

    return pl.pallas_call(
        kernel,
        out_shape=jax.ShapeDtypeStruct((B, S, D), jnp.float32),
        grid_spec=pltpu.PrefetchScalarGridSpec(
            num_scalar_prefetch=0,
            grid=(B, n_groups),
            in_specs=[
                pl.BlockSpec((1, S, D), lambda b, gi: (b, 0, 0)),    # x (bf16)
                pl.BlockSpec((1, D, G), lambda b, gi: (gi, 0, 0)),   # W_q group
                pl.BlockSpec((1, D, G), lambda b, gi: (gi, 0, 0)),   # W_k group
                pl.BlockSpec((1, D, G), lambda b, gi: (gi, 0, 0)),   # W_v group
                pl.BlockSpec((1, 1, G), lambda b, gi: (gi, 0, 0)),   # b_q group
                pl.BlockSpec((1, 1, G), lambda b, gi: (gi, 0, 0)),   # b_k group
                pl.BlockSpec((1, 1, G), lambda b, gi: (gi, 0, 0)),   # b_v group
                pl.BlockSpec((1, G, D), lambda b, gi: (gi, 0, 0)),   # W_o group rows
                pl.BlockSpec((1, D), lambda b, gi: (0, 0)),          # b_o
            ],
            out_specs=pl.BlockSpec((1, S, D), lambda b, gi: (b, 0, 0)),
            scratch_shapes=[],   # accumulation happens in the resident output block
        ),
        compiler_params=pltpu.CompilerParams(
            dimension_semantics=("parallel", "arbitrary"),
            vmem_limit_bytes=64 * 1024 * 1024),
        cost_estimate=cost,
    )(x_bf, w_q, w_k, w_v, b_q, b_k, b_v, w_o, b_o)


def _reference_mha(x, params, *, h):
    """Pure-JAX (f32) replica of the PyTorch forward, for verification."""
    B, S, D = x.shape
    d_k = D // h

    def lin(x, w, b):
        return x @ w.T + b

    q = lin(x, params["wq"], params["bq"]).reshape(B, S, h, d_k).transpose(0, 2, 1, 3)
    k = lin(x, params["wk"], params["bk"]).reshape(B, S, h, d_k).transpose(0, 2, 1, 3)
    v = lin(x, params["wv"], params["bv"]).reshape(B, S, h, d_k).transpose(0, 2, 1, 3)

    scores = jnp.einsum("bhqd,bhkd->bhqk", q, k) / np.sqrt(d_k)
    p = jax.nn.softmax(scores, axis=-1)
    o = jnp.einsum("bhqk,bhkd->bhqd", p, v)
    o = o.transpose(0, 2, 1, 3).reshape(B, S, D)
    return lin(o, params["wo"], params["bo"])


def _init_params(key, d_model):
    """Deterministic init, PyTorch-nn.Linear-style uniform(-1/sqrt(in), 1/sqrt(in))."""
    bound = 1.0 / np.sqrt(d_model)
    keys = jax.random.split(key, 8)
    u = lambda k, shape: jax.random.uniform(
        k, shape, dtype=jnp.float32, minval=-bound, maxval=bound)
    return {
        "wq": u(keys[0], (d_model, d_model)), "bq": u(keys[1], (d_model,)),
        "wk": u(keys[2], (d_model, d_model)), "bk": u(keys[3], (d_model,)),
        "wv": u(keys[4], (d_model, d_model)), "bv": u(keys[5], (d_model,)),
        "wo": u(keys[6], (d_model, d_model)), "bo": u(keys[7], (d_model,)),
    }


if __name__ == "__main__":
    B, S, D, H = 2, 8, 32, 4   # batch, seq (词数), d_model, heads

    key = jax.random.PRNGKey(0)
    kx, kp = jax.random.split(key)
    x = jax.random.normal(kx, (B, S, D), dtype=jnp.float32)
    params = _init_params(kp, D)

    ref = _reference_mha(x, params, h=H)

    # Default grouping: all heads in one group -> single step on the group axis.
    out = jax.block_until_ready(multi_head_attention(x, params, h=H))
    # bf16 matmul operands + approximate reciprocal -> looser tolerance than pure f32.
    np.testing.assert_allclose(np.asarray(out), np.asarray(ref), rtol=2e-2, atol=2e-2)

    # Forced 2-head groups: exercises multi-step accumulation into the resident
    # output block (bias written once at group 0, += for every group).
    out2 = jax.block_until_ready(multi_head_attention(x, params, h=H, group_size=2))
    np.testing.assert_allclose(np.asarray(out2), np.asarray(ref), rtol=2e-2, atol=2e-2)

    print("KERNEL_OK")
</pallas_src>

<mosaic_0001>
module attributes {stable_mosaic.version = 11 : i64} {
  func.func @_mha_kernel(%arg0: i32, %arg1: i32, %arg2: memref<1x8x32xbf16, #tpu.memory_space<vmem>>, %arg3: memref<1x32x32xbf16, #tpu.memory_space<vmem>>, %arg4: memref<1x32x32xbf16, #tpu.memory_space<vmem>>, %arg5: memref<1x32x32xbf16, #tpu.memory_space<vmem>>, %arg6: memref<1x1x32xf32, #tpu.memory_space<vmem>>, %arg7: memref<1x1x32xf32, #tpu.memory_space<vmem>>, %arg8: memref<1x1x32xf32, #tpu.memory_space<vmem>>, %arg9: memref<1x32x32xbf16, #tpu.memory_space<vmem>>, %arg10: memref<1x32xf32, #tpu.memory_space<vmem>>, %arg11: memref<1x8x32xf32, #tpu.memory_space<vmem>>) attributes {dimension_semantics = [#tpu.dimension_semantics<parallel>, #tpu.dimension_semantics<arbitrary>], iteration_bounds = array<i64: 2, 1>, scalar_prefetch = 0 : i64, scratch_operands = 0 : i64, tpu.core_type = #tpu.core_type<tc>, window_params = [{transform_indices = @transform_0, window_bounds = array<i64: 1, 8, 32>}, {transform_indices = @transform_1, window_bounds = array<i64: 1, 32, 32>}, {transform_indices = @transform_2, window_bounds = array<i64: 1, 32, 32>}, {transform_indices = @transform_3, window_bounds = array<i64: 1, 32, 32>}, {transform_indices = @transform_4, window_bounds = array<i64: 1, 1, 32>}, {transform_indices = @transform_5, window_bounds = array<i64: 1, 1, 32>}, {transform_indices = @transform_6, window_bounds = array<i64: 1, 1, 32>}, {transform_indices = @transform_7, window_bounds = array<i64: 1, 32, 32>}, {pipeline_mode = #tpu.pipeline_mode<synchronous>, transform_indices = @transform_8, window_bounds = array<i64: 1, 32>}, {transform_indices = @transform_9, window_bounds = array<i64: 1, 8, 32>}]} {
    %c0 = arith.constant 0 : index
    %c0_0 = arith.constant 0 : index
    %c0_1 = arith.constant 0 : index
    %0 = vector.load %arg2[%c0, %c0_0, %c0_1] : memref<1x8x32xbf16, #tpu.memory_space<vmem>>, vector<1x8x32xbf16>
    %1 = vector.shape_cast %0 : vector<1x8x32xbf16> to vector<8x32xbf16>
    %c0_2 = arith.constant 0 : index
    %c0_3 = arith.constant 0 : index
    %c0_4 = arith.constant 0 : index
    %2 = vector.load %arg3[%c0_2, %c0_3, %c0_4] : memref<1x32x32xbf16, #tpu.memory_space<vmem>>, vector<1x32x32xbf16>
    %3 = vector.shape_cast %2 : vector<1x32x32xbf16> to vector<32x32xbf16>
    %cst = arith.constant dense<0.000000e+00> : vector<8x32xf32>
    %4 = tpu.matmul %1, %3, %cst {dimension_numbers = #tpu.dot_dimension_numbers<[1], [0], [0], [1], [0, 0, 1, 1], [], []>} : vector<8x32xbf16>, vector<32x32xbf16>, vector<8x32xf32> -> vector<8x32xf32>
    %c0_5 = arith.constant 0 : index
    %c0_6 = arith.constant 0 : index
    %c0_7 = arith.constant 0 : index
    %5 = vector.load %arg6[%c0_5, %c0_6, %c0_7] : memref<1x1x32xf32, #tpu.memory_space<vmem>>, vector<1x1x32xf32>
    %6 = vector.shape_cast %5 : vector<1x1x32xf32> to vector<1x32xf32>
    %7 = vector.broadcast %6 : vector<1x32xf32> to vector<8x32xf32>
    %8 = arith.addf %4, %7 : vector<8x32xf32>
    %9 = arith.truncf %8 : vector<8x32xf32> to vector<8x32xbf16>
    %c0_8 = arith.constant 0 : index
    %c0_9 = arith.constant 0 : index
    %c0_10 = arith.constant 0 : index
    %10 = vector.load %arg4[%c0_8, %c0_9, %c0_10] : memref<1x32x32xbf16, #tpu.memory_space<vmem>>, vector<1x32x32xbf16>
    %11 = vector.shape_cast %10 : vector<1x32x32xbf16> to vector<32x32xbf16>
    %cst_11 = arith.constant dense<0.000000e+00> : vector<8x32xf32>
    %12 = tpu.matmul %1, %11, %cst_11 {dimension_numbers = #tpu.dot_dimension_numbers<[1], [0], [0], [1], [0, 0, 1, 1], [], []>} : vector<8x32xbf16>, vector<32x32xbf16>, vector<8x32xf32> -> vector<8x32xf32>
    %c0_12 = arith.constant 0 : index
    %c0_13 = arith.constant 0 : index
    %c0_14 = arith.constant 0 : index
    %13 = vector.load %arg7[%c0_12, %c0_13, %c0_14] : memref<1x1x32xf32, #tpu.memory_space<vmem>>, vector<1x1x32xf32>
    %14 = vector.shape_cast %13 : vector<1x1x32xf32> to vector<1x32xf32>
    %15 = vector.broadcast %14 : vector<1x32xf32> to vector<8x32xf32>
    %16 = arith.addf %12, %15 : vector<8x32xf32>
    %17 = arith.truncf %16 : vector<8x32xf32> to vector<8x32xbf16>
    %c0_15 = arith.constant 0 : index
    %c0_16 = arith.constant 0 : index
    %c0_17 = arith.constant 0 : index
    %18 = vector.load %arg5[%c0_15, %c0_16, %c0_17] : memref<1x32x32xbf16, #tpu.memory_space<vmem>>, vector<1x32x32xbf16>
    %19 = vector.shape_cast %18 : vector<1x32x32xbf16> to vector<32x32xbf16>
    %cst_18 = arith.constant dense<0.000000e+00> : vector<8x32xf32>
    %20 = tpu.matmul %1, %19, %cst_18 {dimension_numbers = #tpu.dot_dimension_numbers<[1], [0], [0], [1], [0, 0, 1, 1], [], []>} : vector<8x32xbf16>, vector<32x32xbf16>, vector<8x32xf32> -> vector<8x32xf32>
    %c0_19 = arith.constant 0 : index
    %c0_20 = arith.constant 0 : index
    %c0_21 = arith.constant 0 : index
    %21 = vector.load %arg8[%c0_19, %c0_20, %c0_21] : memref<1x1x32xf32, #tpu.memory_space<vmem>>, vector<1x1x32xf32>
    %22 = vector.shape_cast %21 : vector<1x1x32xf32> to vector<1x32xf32>
    %23 = vector.broadcast %22 : vector<1x32xf32> to vector<8x32xf32>
    %24 = arith.addf %20, %23 : vector<8x32xf32>
    %25 = arith.truncf %24 : vector<8x32xf32> to vector<8x32xbf16>
    %26 = vector.extract_strided_slice %9 {offsets = [0, 0], sizes = [8, 8], strides = [1, 1]} : vector<8x32xbf16> to vector<8x8xbf16>
    %27 = vector.extract_strided_slice %17 {offsets = [0, 0], sizes = [8, 8], strides = [1, 1]} : vector<8x32xbf16> to vector<8x8xbf16>
    %cst_22 = arith.constant dense<0.000000e+00> : vector<8x8xf32>
    %28 = tpu.matmul %26, %27, %cst_22 {dimension_numbers = #tpu.dot_dimension_numbers<[1], [1], [0], [0], [0, 0, 1, 0], [], []>} : vector<8x8xbf16>, vector<8x8xbf16>, vector<8x8xf32> -> vector<8x8xf32>
    %cst_23 = arith.constant dense<0xFF800000> : vector<8xf32>
    %29 = vector.multi_reduction <maximumf>, %28, %cst_23 [1] : vector<8x8xf32> to vector<8xf32>
    %30 = vector.shape_cast %29 : vector<8xf32> to vector<8x1xf32>
    %31 = vector.broadcast %30 : vector<8x1xf32> to vector<8x8xf32>
    %32 = arith.subf %28, %31 : vector<8x8xf32>
    %33 = math.exp %32 : vector<8x8xf32>
    %cst_24 = arith.constant dense<0.000000e+00> : vector<8xf32>
    %34 = vector.multi_reduction <add>, %33, %cst_24 [1] : vector<8x8xf32> to vector<8xf32>
    %35 = vector.shape_cast %34 : vector<8xf32> to vector<8x1xf32>
    %36 = tpu.reciprocal %35 {approx = true} : vector<8x1xf32> -> vector<8x1xf32>
    %37 = vector.broadcast %36 : vector<8x1xf32> to vector<8x8xf32>
    %38 = arith.mulf %33, %37 : vector<8x8xf32>
    %39 = arith.truncf %38 : vector<8x8xf32> to vector<8x8xbf16>
    %40 = vector.extract_strided_slice %25 {offsets = [0, 0], sizes = [8, 8], strides = [1, 1]} : vector<8x32xbf16> to vector<8x8xbf16>
    %cst_25 = arith.constant dense<0.000000e+00> : vector<8x8xf32>
    %41 = tpu.matmul %39, %40, %cst_25 {dimension_numbers = #tpu.dot_dimension_numbers<[1], [0], [0], [1], [0, 0, 1, 1], [], []>} : vector<8x8xbf16>, vector<8x8xbf16>, vector<8x8xf32> -> vector<8x8xf32>
    %42 = vector.extract_strided_slice %9 {offsets = [0, 8], sizes = [8, 8], strides = [1, 1]} : vector<8x32xbf16> to vector<8x8xbf16>
    %43 = vector.extract_strided_slice %17 {offsets = [0, 8], sizes = [8, 8], strides = [1, 1]} : vector<8x32xbf16> to vector<8x8xbf16>
    %cst_26 = arith.constant dense<0.000000e+00> : vector<8x8xf32>
    %44 = tpu.matmul %42, %43, %cst_26 {dimension_numbers = #tpu.dot_dimension_numbers<[1], [1], [0], [0], [0, 0, 1, 0], [], []>} : vector<8x8xbf16>, vector<8x8xbf16>, vector<8x8xf32> -> vector<8x8xf32>
    %cst_27 = arith.constant dense<0xFF800000> : vector<8xf32>
    %45 = vector.multi_reduction <maximumf>, %44, %cst_27 [1] : vector<8x8xf32> to vector<8xf32>
    %46 = vector.shape_cast %45 : vector<8xf32> to vector<8x1xf32>
    %47 = vector.broadcast %46 : vector<8x1xf32> to vector<8x8xf32>
    %48 = arith.subf %44, %47 : vector<8x8xf32>
    %49 = math.exp %48 : vector<8x8xf32>
    %cst_28 = arith.constant dense<0.000000e+00> : vector<8xf32>
    %50 = vector.multi_reduction <add>, %49, %cst_28 [1] : vector<8x8xf32> to vector<8xf32>
    %51 = vector.shape_cast %50 : vector<8xf32> to vector<8x1xf32>
    %52 = tpu.reciprocal %51 {approx = true} : vector<8x1xf32> -> vector<8x1xf32>
    %53 = vector.broadcast %52 : vector<8x1xf32> to vector<8x8xf32>
    %54 = arith.mulf %49, %53 : vector<8x8xf32>
    %55 = arith.truncf %54 : vector<8x8xf32> to vector<8x8xbf16>
    %56 = vector.extract_strided_slice %25 {offsets = [0, 8], sizes = [8, 8], strides = [1, 1]} : vector<8x32xbf16> to vector<8x8xbf16>
    %cst_29 = arith.constant dense<0.000000e+00> : vector<8x8xf32>
    %57 = tpu.matmul %55, %56, %cst_29 {dimension_numbers = #tpu.dot_dimension_numbers<[1], [0], [0], [1], [0, 0, 1, 1], [], []>} : vector<8x8xbf16>, vector<8x8xbf16>, vector<8x8xf32> -> vector<8x8xf32>
    %58 = vector.extract_strided_slice %9 {offsets = [0, 16], sizes = [8, 8], strides = [1, 1]} : vector<8x32xbf16> to vector<8x8xbf16>
    %59 = vector.extract_strided_slice %17 {offsets = [0, 16], sizes = [8, 8], strides = [1, 1]} : vector<8x32xbf16> to vector<8x8xbf16>
    %cst_30 = arith.constant dense<0.000000e+00> : vector<8x8xf32>
    %60 = tpu.matmul %58, %59, %cst_30 {dimension_numbers = #tpu.dot_dimension_numbers<[1], [1], [0], [0], [0, 0, 1, 0], [], []>} : vector<8x8xbf16>, vector<8x8xbf16>, vector<8x8xf32> -> vector<8x8xf32>
    %cst_31 = arith.constant dense<0xFF800000> : vector<8xf32>
    %61 = vector.multi_reduction <maximumf>, %60, %cst_31 [1] : vector<8x8xf32> to vector<8xf32>
    %62 = vector.shape_cast %61 : vector<8xf32> to vector<8x1xf32>
    %63 = vector.broadcast %62 : vector<8x1xf32> to vector<8x8xf32>
    %64 = arith.subf %60, %63 : vector<8x8xf32>
    %65 = math.exp %64 : vector<8x8xf32>
    %cst_32 = arith.constant dense<0.000000e+00> : vector<8xf32>
    %66 = vector.multi_reduction <add>, %65, %cst_32 [1] : vector<8x8xf32> to vector<8xf32>
    %67 = vector.shape_cast %66 : vector<8xf32> to vector<8x1xf32>
    %68 = tpu.reciprocal %67 {approx = true} : vector<8x1xf32> -> vector<8x1xf32>
    %69 = vector.broadcast %68 : vector<8x1xf32> to vector<8x8xf32>
    %70 = arith.mulf %65, %69 : vector<8x8xf32>
    %71 = arith.truncf %70 : vector<8x8xf32> to vector<8x8xbf16>
    %72 = vector.extract_strided_slice %25 {offsets = [0, 16], sizes = [8, 8], strides = [1, 1]} : vector<8x32xbf16> to vector<8x8xbf16>
    %cst_33 = arith.constant dense<0.000000e+00> : vector<8x8xf32>
    %73 = tpu.matmul %71, %72, %cst_33 {dimension_numbers = #tpu.dot_dimension_numbers<[1], [0], [0], [1], [0, 0, 1, 1], [], []>} : vector<8x8xbf16>, vector<8x8xbf16>, vector<8x8xf32> -> vector<8x8xf32>
    %74 = vector.extract_strided_slice %9 {offsets = [0, 24], sizes = [8, 8], strides = [1, 1]} : vector<8x32xbf16> to vector<8x8xbf16>
    %75 = vector.extract_strided_slice %17 {offsets = [0, 24], sizes = [8, 8], strides = [1, 1]} : vector<8x32xbf16> to vector<8x8xbf16>
    %cst_34 = arith.constant dense<0.000000e+00> : vector<8x8xf32>
    %76 = tpu.matmul %74, %75, %cst_34 {dimension_numbers = #tpu.dot_dimension_numbers<[1], [1], [0], [0], [0, 0, 1, 0], [], []>} : vector<8x8xbf16>, vector<8x8xbf16>, vector<8x8xf32> -> vector<8x8xf32>
    %cst_35 = arith.constant dense<0xFF800000> : vector<8xf32>
    %77 = vector.multi_reduction <maximumf>, %76, %cst_35 [1] : vector<8x8xf32> to vector<8xf32>
    %78 = vector.shape_cast %77 : vector<8xf32> to vector<8x1xf32>
    %79 = vector.broadcast %78 : vector<8x1xf32> to vector<8x8xf32>
    %80 = arith.subf %76, %79 : vector<8x8xf32>
    %81 = math.exp %80 : vector<8x8xf32>
    %cst_36 = arith.constant dense<0.000000e+00> : vector<8xf32>
    %82 = vector.multi_reduction <add>, %81, %cst_36 [1] : vector<8x8xf32> to vector<8xf32>
    %83 = vector.shape_cast %82 : vector<8xf32> to vector<8x1xf32>
    %84 = tpu.reciprocal %83 {approx = true} : vector<8x1xf32> -> vector<8x1xf32>
    %85 = vector.broadcast %84 : vector<8x1xf32> to vector<8x8xf32>
    %86 = arith.mulf %81, %85 : vector<8x8xf32>
    %87 = arith.truncf %86 : vector<8x8xf32> to vector<8x8xbf16>
    %88 = vector.extract_strided_slice %25 {offsets = [0, 24], sizes = [8, 8], strides = [1, 1]} : vector<8x32xbf16> to vector<8x8xbf16>
    %cst_37 = arith.constant dense<0.000000e+00> : vector<8x8xf32>
    %89 = tpu.matmul %87, %88, %cst_37 {dimension_numbers = #tpu.dot_dimension_numbers<[1], [0], [0], [1], [0, 0, 1, 1], [], []>} : vector<8x8xbf16>, vector<8x8xbf16>, vector<8x8xf32> -> vector<8x8xf32>
    %90 = tpu.concatenate %41, %57, %73, %89 in 1 : vector<8x8xf32>, vector<8x8xf32>, vector<8x8xf32>, vector<8x8xf32> -> vector<8x32xf32>
    %91 = arith.truncf %90 : vector<8x32xf32> to vector<8x32xbf16>
    %c0_38 = arith.constant 0 : index
    %c0_39 = arith.constant 0 : index
    %c0_40 = arith.constant 0 : index
    %92 = vector.load %arg9[%c0_38, %c0_39, %c0_40] : memref<1x32x32xbf16, #tpu.memory_space<vmem>>, vector<1x32x32xbf16>
    %93 = vector.shape_cast %92 : vector<1x32x32xbf16> to vector<32x32xbf16>
    %cst_41 = arith.constant dense<0.000000e+00> : vector<8x32xf32>
    %94 = tpu.matmul %91, %93, %cst_41 {dimension_numbers = #tpu.dot_dimension_numbers<[1], [0], [0], [1], [0, 0, 1, 1], [], []>} : vector<8x32xbf16>, vector<32x32xbf16>, vector<8x32xf32> -> vector<8x32xf32>
    %c0_i32 = arith.constant 0 : i32
    %95 = arith.cmpi eq, %arg1, %c0_i32 : i32
    %96 = arith.extui %95 : i1 to i32
    %c0_i32_42 = arith.constant 0 : i32
    %97 = arith.cmpi ne, %96, %c0_i32_42 : i32
    scf.if %97 {
      %c0_49 = arith.constant 0 : index
      %c0_50 = arith.constant 0 : index
      %104 = vector.load %arg10[%c0_49, %c0_50] : memref<1x32xf32, #tpu.memory_space<vmem>>, vector<1x32xf32>
      %105 = vector.shape_cast %104 : vector<1x32xf32> to vector<1x32xf32>
      %106 = vector.broadcast %105 : vector<1x32xf32> to vector<8x32xf32>
      %c0_51 = arith.constant 0 : index
      %c0_52 = arith.constant 0 : index
      %c0_53 = arith.constant 0 : index
      %107 = vector.load %arg11[%c0_51, %c0_52, %c0_53] : memref<1x8x32xf32, #tpu.memory_space<vmem>>, vector<1x8x32xf32>
      %108 = vector.shape_cast %107 : vector<1x8x32xf32> to vector<8x32xf32>
      %109 = vector.shape_cast %106 : vector<8x32xf32> to vector<1x8x32xf32>
      tpu.vector_store %arg11[%c0_51, %c0_52, %c0_53], %109 {strides = array<i32>} : memref<1x8x32xf32, #tpu.memory_space<vmem>>, vector<1x8x32xf32>,
    } else {
    }
    %c0_43 = arith.constant 0 : index
    %c0_44 = arith.constant 0 : index
    %c0_45 = arith.constant 0 : index
    %98 = vector.load %arg11[%c0_43, %c0_44, %c0_45] : memref<1x8x32xf32, #tpu.memory_space<vmem>>, vector<1x8x32xf32>
    %99 = vector.shape_cast %98 : vector<1x8x32xf32> to vector<8x32xf32>
    %100 = arith.addf %99, %94 : vector<8x32xf32>
    %c0_46 = arith.constant 0 : index
    %c0_47 = arith.constant 0 : index
    %c0_48 = arith.constant 0 : index
    %101 = vector.load %arg11[%c0_46, %c0_47, %c0_48] : memref<1x8x32xf32, #tpu.memory_space<vmem>>, vector<1x8x32xf32>
    %102 = vector.shape_cast %101 : vector<1x8x32xf32> to vector<8x32xf32>
    %103 = vector.shape_cast %100 : vector<8x32xf32> to vector<1x8x32xf32>
    tpu.vector_store %arg11[%c0_46, %c0_47, %c0_48], %103 {strides = array<i32>} : memref<1x8x32xf32, #tpu.memory_space<vmem>>, vector<1x8x32xf32>,
    return
  }
  func.func @transform_0(%arg0: i32, %arg1: i32) -> (i32, i32, i32) {
    %c0_i32 = arith.constant 0 : i32
    %c0_i32_0 = arith.constant 0 : i32
    %c0_i32_1 = arith.constant 0 : i32
    return %arg0, %c0_i32, %c0_i32_0 : i32, i32, i32
  }
  func.func @transform_1(%arg0: i32, %arg1: i32) -> (i32, i32, i32) {
    %c0_i32 = arith.constant 0 : i32
    %c0_i32_0 = arith.constant 0 : i32
    %c0_i32_1 = arith.constant 0 : i32
    return %arg1, %c0_i32, %c0_i32_0 : i32, i32, i32
  }
  func.func @transform_2(%arg0: i32, %arg1: i32) -> (i32, i32, i32) {
    %c0_i32 = arith.constant 0 : i32
    %c0_i32_0 = arith.constant 0 : i32
    %c0_i32_1 = arith.constant 0 : i32
    return %arg1, %c0_i32, %c0_i32_0 : i32, i32, i32
  }
  func.func @transform_3(%arg0: i32, %arg1: i32) -> (i32, i32, i32) {
    %c0_i32 = arith.constant 0 : i32
    %c0_i32_0 = arith.constant 0 : i32
    %c0_i32_1 = arith.constant 0 : i32
    return %arg1, %c0_i32, %c0_i32_0 : i32, i32, i32
  }
  func.func @transform_4(%arg0: i32, %arg1: i32) -> (i32, i32, i32) {
    %c0_i32 = arith.constant 0 : i32
    %c0_i32_0 = arith.constant 0 : i32
    %c0_i32_1 = arith.constant 0 : i32
    return %arg1, %c0_i32, %c0_i32_0 : i32, i32, i32
  }
  func.func @transform_5(%arg0: i32, %arg1: i32) -> (i32, i32, i32) {
    %c0_i32 = arith.constant 0 : i32
    %c0_i32_0 = arith.constant 0 : i32
    %c0_i32_1 = arith.constant 0 : i32
    return %arg1, %c0_i32, %c0_i32_0 : i32, i32, i32
  }
  func.func @transform_6(%arg0: i32, %arg1: i32) -> (i32, i32, i32) {
    %c0_i32 = arith.constant 0 : i32
    %c0_i32_0 = arith.constant 0 : i32
    %c0_i32_1 = arith.constant 0 : i32
    return %arg1, %c0_i32, %c0_i32_0 : i32, i32, i32
  }
  func.func @transform_7(%arg0: i32, %arg1: i32) -> (i32, i32, i32) {
    %c0_i32 = arith.constant 0 : i32
    %c0_i32_0 = arith.constant 0 : i32
    %c0_i32_1 = arith.constant 0 : i32
    return %arg1, %c0_i32, %c0_i32_0 : i32, i32, i32
  }
  func.func @transform_8(%arg0: i32, %arg1: i32) -> (i32, i32) {
    %c0_i32 = arith.constant 0 : i32
    %c0_i32_0 = arith.constant 0 : i32
    %c0_i32_1 = arith.constant 0 : i32
    return %c0_i32, %c0_i32_0 : i32, i32
  }
  func.func @transform_9(%arg0: i32, %arg1: i32) -> (i32, i32, i32) {
    %c0_i32 = arith.constant 0 : i32
    %c0_i32_0 = arith.constant 0 : i32
    %c0_i32_1 = arith.constant 0 : i32
    return %arg0, %c0_i32, %c0_i32_0 : i32, i32, i32
  }
}

</mosaic_0001>

<llo_original>
// kernel: tpu_custom_call.1
$region0: #{tpu_custom_call.1}
  #allocation0 [shape = 'u32[]', space=smem, size = 0x4, offset = 0x4, fixed_abs, tag = 'smem constant byte address 0x4 - core index']
  #allocation1 [shape = 'u32[144,128]{1,0:T(1,128)}', space=vmem, size = 0x12000, scoped, tag = 'internal scratch']
  %s0 = inlined_call_operand.hbm [shape: bf16[2,8,32], index: 0, kind: input, shape index: {}]
  %s1 = inlined_call_operand.hbm [shape: bf16[1,32,32], index: 1, kind: input, shape index: {}]
  %s2 = inlined_call_operand.hbm [shape: bf16[1,32,32], index: 2, kind: input, shape index: {}]
  %s3 = inlined_call_operand.hbm [shape: bf16[1,32,32], index: 3, kind: input, shape index: {}]
  %s4 = inlined_call_operand.hbm [shape: f32[1,1,32], index: 4, kind: input, shape index: {}]
  %s5 = inlined_call_operand.hbm [shape: f32[1,1,32], index: 5, kind: input, shape index: {}]
  %s6 = inlined_call_operand.hbm [shape: f32[1,1,32], index: 6, kind: input, shape index: {}]
  %s7 = inlined_call_operand.hbm [shape: bf16[1,32,32], index: 7, kind: input, shape index: {}]
  %s8 = inlined_call_operand.hbm [shape: f32[1,32], index: 8, kind: input, shape index: {}]
  %s9 = inlined_call_operand.hbm [shape: f32[2,8,32], index: 9, kind: output, shape index: {}]
  %s10 = sld [smem:[#allocation0]]
  $region109: #{tpu_custom_call.1} parent=0
    _
  %s12 = ssub.s32 1, %s10
  %s13 = scalar_select 0, %s12, %s10
  $region1: #{tpu_custom_call.1} parent=0
    #allocation2 [shape = 'u8[4096]{0}', space=vmem, size = 0x1000, scoped, tag = 'input window, operand 0']
    #allocation3 [shape = 's32[2]{0}', space=sflag, size = 0x8, scoped, tag = 'scoped memory for tpu_custom_call.1']
    #allocation4 [shape = 's32[2]{0}', space=sflag, size = 0x8, scoped, tag = 'scoped memory for tpu_custom_call.1']
    #allocation5 [shape = 'u8[8192]{0}', space=vmem, size = 0x2000, scoped, tag = 'input window, operand 1, single buffered']
    #allocation6 [shape = 's32[1]{0}', space=sflag, size = 0x4, scoped, tag = 'scoped memory for tpu_custom_call.1']
    #allocation7 [shape = 'u8[8192]{0}', space=vmem, size = 0x2000, scoped, tag = 'input window, operand 2, single buffered']
    #allocation8 [shape = 'u8[8192]{0}', space=vmem, size = 0x2000, scoped, tag = 'input window, operand 3, single buffered']
    #allocation9 [shape = 's32[1]{0}', space=sflag, size = 0x4, scoped, tag = 'scoped memory for tpu_custom_call.1']
    #allocation10 [shape = 'u8[512]{0}', space=vmem, size = 0x400, scoped, tag = 'input window, operand 4, single buffered']
    #allocation11 [shape = 'u8[512]{0}', space=vmem, size = 0x400, scoped, tag = 'input window, operand 5, single buffered']
    #allocation12 [shape = 's32[1]{0}', space=sflag, size = 0x4, scoped, tag = 'scoped memory for tpu_custom_call.1']
    #allocation13 [shape = 'u8[512]{0}', space=vmem, size = 0x400, scoped, tag = 'input window, operand 6, single buffered']
    #allocation14 [shape = 'u8[8192]{0}', space=vmem, size = 0x2000, scoped, tag = 'input window, operand 7, single buffered']
    #allocation15 [shape = 's32[1]{0}', space=sflag, size = 0x4, scoped, tag = 'scoped memory for tpu_custom_call.1']
    #allocation16 [shape = 'u8[512]{0}', space=vmem, size = 0x400, scoped, tag = 'input window, operand 8, single buffered']
    #allocation17 [shape = 'u8[8192]{0}', space=vmem, size = 0x2000, scoped, tag = 'output window, operand 0']
    %14 = vsyncpa [#allocation3], 0
    %s15 = scalar_lea.sflag [#allocation3], 1
    %16 = vsyncpa %s15, 0
    %17 = vsyncpa [#allocation6], 0
    %18 = vsyncpa [#allocation9], 0
    %19 = vsyncpa [#allocation12], 0
    %20 = vsyncpa [#allocation15], 0
    %21 = vsyncpa [#allocation4], 0
    %s22 = scalar_lea.sflag [#allocation4], 1
    %23 = vsyncpa %s22, 0
    loop: start=0, step=1, limit=4
    $region2: #{tpu_custom_call.1} parent=1 // loop_pre_header
      _
    $region3: #{tpu_custom_call.1} parent=1 // loop_header
      %s25 = sphi 0, %s29
      %p26 = scmp.ge.s32.totalorder %s25, 4
      %s32 = sphi 0, %s44
      %s33 = sphi 0, %s40
      %s34 = sphi 0, %s32
      %s35 = sphi 0, %s33
      %s36 = sphi 0, %s34
      %s37 = sphi 0, %s35
      %s47 = sphi 0, %s49
      %s50 = sphi 0, %s47
      %s51 = sphi 0, %s50
      %s67 = sphi 0, %s51
      %s73 = sphi 0, %s75
      %s76 = sphi 0, %s73
      %s77 = sphi 0, %s76
      %s93 = sphi 0, %s77
      %s99 = sphi 0, %s101
      %s102 = sphi 0, %s99
      %s103 = sphi 0, %s102
      %s119 = sphi 0, %s103
      %s125 = sphi 0, %s127
      %s128 = sphi 0, %s125
      %s129 = sphi 0, %s128
      %s145 = sphi 0, %s129
      %s151 = sphi 0, %s153
      %s154 = sphi 0, %s151
      %s155 = sphi 0, %s154
      %s171 = sphi 0, %s155
      %s177 = sphi 0, %s179
      %s180 = sphi 0, %s177
      %s181 = sphi 0, %s180
      %s197 = sphi 0, %s181
      %s203 = sphi 0, %s205
      %s206 = sphi 0, %s203
      %s207 = sphi 0, %s206
      %s223 = sphi 0, %s207
      %s229 = sphi 0, %s231
      %s232 = sphi 0, %s229
      %s233 = sphi 0, %s232
      %s249 = sphi 0, %s233
      %s253 = sphi 0, %s253
      %s255 = sphi 0, %s253
      %s256 = sphi 0, %s255
      %s270 = sphi 0, %s256
      %s276 = sphi 0, %s278
      %s279 = sphi 0, %s276
      %s280 = sphi 0, %s279
      %s296 = sphi 0, %s280
    $region4: #{tpu_custom_call.1} parent=1 // loop_header_branch
      %28 = sbr.rel (%p26) target = $region8
    $region5: #{tpu_custom_call.1} parent=1 // loop_body
      %s30 = ssub.s32 %s25, 1
      %s31 = ssub.s32 %s25, 2
      %s38 = sadd.s32 1, %s33
      %p39 = scmp.ge.s32.totalorder %s38, 1
      %s40 = scalar_select %p39, 0, %s38
      %s41 = sadd.s32 1, %s32
      %s42 = scalar_select %p39, %s41, %s32
      %p43 = scmp.ge.s32.totalorder %s42, 2
      %s44 = scalar_select %p43, 0, %s42
      %s45 = ssub.s32 %s32, %s44
      %p46 = scmp.eq.s32.totalorder %s45, 0
      %s48 = sadd.s32 %s47, 1
      %s49 = scalar_select %p46, %s47, %s48
      %p52 = pneg %p46
      %p53 = scmp.eq.s32.totalorder %s25, 1
      %p54 = por %p52, %p53
      %p55 = scmp.ne.s32.totalorder %s47, %s50
      %p56 = scmp.eq.s32.totalorder %s25, 0
      %p57 = por %p55, %p56
      %p58 = scmp.ne.s32.totalorder %s47, %s50
      %p59 = scmp.eq.s32.totalorder %s30, 1
      %p60 = por %p58, %p59
      %p61 = scmp.ne.s32.totalorder %s50, %s51
      %p62 = scmp.eq.s32.totalorder %s30, 0
      %p63 = por %p61, %p62
      %p64 = scmp.ne.s32.totalorder %s50, %s51
      %p65 = scmp.eq.s32.totalorder %s31, 1
      %p66 = por %p64, %p65
      %p68 = scmp.ne.s32.totalorder %s51, %s67
      %p69 = scmp.eq.s32.totalorder %s31, 0
      %p70 = por %p68, %p69
      %s71 = ssub.s32 %s33, %s40
      %p72 = scmp.eq.s32.totalorder %s71, 0
      %s74 = sadd.s32 %s73, 1
      %s75 = scalar_select %p72, %s73, %s74
      %p78 = pneg %p72
      %p79 = scmp.eq.s32.totalorder %s25, 1
      %p80 = por %p78, %p79
      %p81 = scmp.ne.s32.totalorder %s73, %s76
      %p82 = scmp.eq.s32.totalorder %s25, 0
      %p83 = por %p81, %p82
      %p84 = scmp.ne.s32.totalorder %s73, %s76
      %p85 = scmp.eq.s32.totalorder %s30, 1
      %p86 = por %p84, %p85
      %p87 = scmp.ne.s32.totalorder %s76, %s77
      %p88 = scmp.eq.s32.totalorder %s30, 0
      %p89 = por %p87, %p88
      %p90 = scmp.ne.s32.totalorder %s76, %s77
      %p91 = scmp.eq.s32.totalorder %s31, 1
      %p92 = por %p90, %p91
      %p94 = scmp.ne.s32.totalorder %s77, %s93
      %p95 = scmp.eq.s32.totalorder %s31, 0
      %p96 = por %p94, %p95
      %s97 = ssub.s32 %s33, %s40
      %p98 = scmp.eq.s32.totalorder %s97, 0
      %s100 = sadd.s32 %s99, 1
      %s101 = scalar_select %p98, %s99, %s100
      %p104 = pneg %p98
      %p105 = scmp.eq.s32.totalorder %s25, 1
      %p106 = por %p104, %p105
      %p107 = scmp.ne.s32.totalorder %s99, %s102
      %p108 = scmp.eq.s32.totalorder %s25, 0
      %p109 = por %p107, %p108
      %p110 = scmp.ne.s32.totalorder %s99, %s102
      %p111 = scmp.eq.s32.totalorder %s30, 1
      %p112 = por %p110, %p111
      %p113 = scmp.ne.s32.totalorder %s102, %s103
      %p114 = scmp.eq.s32.totalorder %s30, 0
      %p115 = por %p113, %p114
      %p116 = scmp.ne.s32.totalorder %s102, %s103
      %p117 = scmp.eq.s32.totalorder %s31, 1
      %p118 = por %p116, %p117
      %p120 = scmp.ne.s32.totalorder %s103, %s119
      %p121 = scmp.eq.s32.totalorder %s31, 0
      %p122 = por %p120, %p121
      %s123 = ssub.s32 %s33, %s40
      %p124 = scmp.eq.s32.totalorder %s123, 0
      %s126 = sadd.s32 %s125, 1
      %s127 = scalar_select %p124, %s125, %s126
      %p130 = pneg %p124
      %p131 = scmp.eq.s32.totalorder %s25, 1
      %p132 = por %p130, %p131
      %p133 = scmp.ne.s32.totalorder %s125, %s128
      %p134 = scmp.eq.s32.totalorder %s25, 0
      %p135 = por %p133, %p134
      %p136 = scmp.ne.s32.totalorder %s125, %s128
      %p137 = scmp.eq.s32.totalorder %s30, 1
      %p138 = por %p136, %p137
      %p139 = scmp.ne.s32.totalorder %s128, %s129
      %p140 = scmp.eq.s32.totalorder %s30, 0
      %p141 = por %p139, %p140
      %p142 = scmp.ne.s32.totalorder %s128, %s129
      %p143 = scmp.eq.s32.totalorder %s31, 1
      %p144 = por %p142, %p143
      %p146 = scmp.ne.s32.totalorder %s129, %s145
      %p147 = scmp.eq.s32.totalorder %s31, 0
      %p148 = por %p146, %p147
      %s149 = ssub.s32 %s33, %s40
      %p150 = scmp.eq.s32.totalorder %s149, 0
      %s152 = sadd.s32 %s151, 1
      %s153 = scalar_select %p150, %s151, %s152
      %p156 = pneg %p150
      %p157 = scmp.eq.s32.totalorder %s25, 1
      %p158 = por %p156, %p157
      %p159 = scmp.ne.s32.totalorder %s151, %s154
      %p160 = scmp.eq.s32.totalorder %s25, 0
      %p161 = por %p159, %p160
      %p162 = scmp.ne.s32.totalorder %s151, %s154
      %p163 = scmp.eq.s32.totalorder %s30, 1
      %p164 = por %p162, %p163
      %p165 = scmp.ne.s32.totalorder %s154, %s155
      %p166 = scmp.eq.s32.totalorder %s30, 0
      %p167 = por %p165, %p166
      %p168 = scmp.ne.s32.totalorder %s154, %s155
      %p169 = scmp.eq.s32.totalorder %s31, 1
      %p170 = por %p168, %p169
      %p172 = scmp.ne.s32.totalorder %s155, %s171
      %p173 = scmp.eq.s32.totalorder %s31, 0
      %p174 = por %p172, %p173
      %s175 = ssub.s32 %s33, %s40
      %p176 = scmp.eq.s32.totalorder %s175, 0
      %s178 = sadd.s32 %s177, 1
      %s179 = scalar_select %p176, %s177, %s178
      %p182 = pneg %p176
      %p183 = scmp.eq.s32.totalorder %s25, 1
      %p184 = por %p182, %p183
      %p185 = scmp.ne.s32.totalorder %s177, %s180
      %p186 = scmp.eq.s32.totalorder %s25, 0
      %p187 = por %p185, %p186
      %p188 = scmp.ne.s32.totalorder %s177, %s180
      %p189 = scmp.eq.s32.totalorder %s30, 1
      %p190 = por %p188, %p189
      %p191 = scmp.ne.s32.totalorder %s180, %s181
      %p192 = scmp.eq.s32.totalorder %s30, 0
      %p193 = por %p191, %p192
      %p194 = scmp.ne.s32.totalorder %s180, %s181
      %p195 = scmp.eq.s32.totalorder %s31, 1
      %p196 = por %p194, %p195
      %p198 = scmp.ne.s32.totalorder %s181, %s197
      %p199 = scmp.eq.s32.totalorder %s31, 0
      %p200 = por %p198, %p199
      %s201 = ssub.s32 %s33, %s40
      %p202 = scmp.eq.s32.totalorder %s201, 0
      %s204 = sadd.s32 %s203, 1
      %s205 = scalar_select %p202, %s203, %s204
      %p208 = pneg %p202
      %p209 = scmp.eq.s32.totalorder %s25, 1
      %p210 = por %p208, %p209
      %p211 = scmp.ne.s32.totalorder %s203, %s206
      %p212 = scmp.eq.s32.totalorder %s25, 0
      %p213 = por %p211, %p212
      %p214 = scmp.ne.s32.totalorder %s203, %s206
      %p215 = scmp.eq.s32.totalorder %s30, 1
      %p216 = por %p214, %p215
      %p217 = scmp.ne.s32.totalorder %s206, %s207
      %p218 = scmp.eq.s32.totalorder %s30, 0
      %p219 = por %p217, %p218
      %p220 = scmp.ne.s32.totalorder %s206, %s207
      %p221 = scmp.eq.s32.totalorder %s31, 1
      %p222 = por %p220, %p221
      %p224 = scmp.ne.s32.totalorder %s207, %s223
      %p225 = scmp.eq.s32.totalorder %s31, 0
      %p226 = por %p224, %p225
      %s227 = ssub.s32 %s33, %s40
      %p228 = scmp.eq.s32.totalorder %s227, 0
      %s230 = sadd.s32 %s229, 1
      %s231 = scalar_select %p228, %s229, %s230
      %p234 = pneg %p228
      %p235 = scmp.eq.s32.totalorder %s25, 1
      %p236 = por %p234, %p235
      %p237 = scmp.ne.s32.totalorder %s229, %s232
      %p238 = scmp.eq.s32.totalorder %s25, 0
      %p239 = por %p237, %p238
      %p240 = scmp.ne.s32.totalorder %s229, %s232
      %p241 = scmp.eq.s32.totalorder %s30, 1
      %p242 = por %p240, %p241
      %p243 = scmp.ne.s32.totalorder %s232, %s233
      %p244 = scmp.eq.s32.totalorder %s30, 0
      %p245 = por %p243, %p244
      %p246 = scmp.ne.s32.totalorder %s232, %s233
      %p247 = scmp.eq.s32.totalorder %s31, 1
      %p248 = por %p246, %p247
      %p250 = scmp.ne.s32.totalorder %s233, %s249
      %p251 = scmp.eq.s32.totalorder %s31, 0
      %p252 = por %p250, %p251
      %s254 = sadd.s32 %s253, 1
      %p257 = scmp.eq.s32.totalorder %s25, 1
      %p258 = scmp.ne.s32.totalorder %s253, %s255
      %p259 = scmp.eq.s32.totalorder %s25, 0
      %p260 = por %p258, %p259
      %p261 = scmp.ne.s32.totalorder %s253, %s255
      %p262 = scmp.eq.s32.totalorder %s30, 1
      %p263 = por %p261, %p262
      %p264 = scmp.ne.s32.totalorder %s255, %s256
      %p265 = scmp.eq.s32.totalorder %s30, 0
      %p266 = por %p264, %p265
      %p267 = scmp.ne.s32.totalorder %s255, %s256
      %p268 = scmp.eq.s32.totalorder %s31, 1
      %p269 = por %p267, %p268
      %p271 = scmp.ne.s32.totalorder %s256, %s270
      %p272 = scmp.eq.s32.totalorder %s31, 0
      %p273 = por %p271, %p272
      %s274 = ssub.s32 %s32, %s44
      %p275 = scmp.eq.s32.totalorder %s274, 0
      %s277 = sadd.s32 %s276, 1
      %s278 = scalar_select %p275, %s276, %s277
      %p281 = pneg %p275
      %p282 = scmp.eq.s32.totalorder %s25, 1
      %p283 = por %p281, %p282
      %p284 = scmp.ne.s32.totalorder %s276, %s279
      %p285 = scmp.eq.s32.totalorder %s25, 0
      %p286 = por %p284, %p285
      %p287 = scmp.ne.s32.totalorder %s276, %s279
      %p288 = scmp.eq.s32.totalorder %s30, 1
      %p289 = por %p287, %p288
      %p290 = scmp.ne.s32.totalorder %s279, %s280
      %p291 = scmp.eq.s32.totalorder %s30, 0
      %p292 = por %p290, %p291
      %p293 = scmp.ne.s32.totalorder %s279, %s280
      %p294 = scmp.eq.s32.totalorder %s31, 1
      %p295 = por %p293, %p294
      %p297 = scmp.ne.s32.totalorder %s280, %s296
      %p298 = scmp.eq.s32.totalorder %s31, 0
      %p299 = por %p297, %p298
      %p300 = scmp.le.s32.totalorder 1, %s25
      %p301 = scmp.lt.s32.totalorder %s25, 3
      %p302 = pnand %p300, %p301
      %p303 = pneg %p302
      // Predicated region
      $region9: #{tpu_custom_call.1} parent=5 // pred_check
        _
      $region10: #{tpu_custom_call.1} parent=5 // pred_check_branch
        %305 = sbr.rel (%p302) target = $region12
      $region11: #{tpu_custom_call.1} parent=5 // pred_region
        %s306 = ssub.s32 %s25, 1
        // Predicated region
        $region13: #{tpu_custom_call.1} parent=11 // pred_check
          %p307 = pneg %p89
        $region14: #{tpu_custom_call.1} parent=11 // pred_check_branch
          %309 = sbr.rel (%p307) target = $region16
        $region15: #{tpu_custom_call.1} parent=11 // pred_region
          %s311 = ssub.s32 256, 256
          %312 = vsyncadd [#allocation6], %s311
          %s313 = smul.addr %s35, 4
          %s314 = smul.addr %s313, 64
          %s315 = scalar_lea.hbm %s1, %s314
          %s316 = sshll.u32 [#allocation5], 4
          %s317 = int_to_ptr.vmem [resolvable:$true] %s316
          %322 = dma.hbm_to_vmem [thread:$0]  %s315, 256, %s317, [#allocation6], 64, 64, 4
        $region16: #{tpu_custom_call.1} parent=11 // pred_fallthru
          _
        // Predicated region
        $region17: #{tpu_custom_call.1} parent=11 // pred_check
          %p323 = pneg %p115
        $region18: #{tpu_custom_call.1} parent=11 // pred_check_branch
          %325 = sbr.rel (%p323) target = $region20
        $region19: #{tpu_custom_call.1} parent=11 // pred_region
          %s327 = ssub.s32 256, 256
          %328 = vsyncadd [#allocation6], %s327
          %s329 = smul.addr %s35, 4
          %s330 = smul.addr %s329, 64
          %s331 = scalar_lea.hbm %s2, %s330
          %s332 = sshll.u32 [#allocation7], 4
          %s333 = int_to_ptr.vmem [resolvable:$true] %s332
          %338 = dma.hbm_to_vmem [thread:$0]  %s331, 256, %s333, [#allocation6], 64, 64, 4
        $region20: #{tpu_custom_call.1} parent=11 // pred_fallthru
          _
        // Predicated region
        $region21: #{tpu_custom_call.1} parent=11 // pred_check
          %p339 = pneg %p141
        $region22: #{tpu_custom_call.1} parent=11 // pred_check_branch
          %341 = sbr.rel (%p339) target = $region24
        $region23: #{tpu_custom_call.1} parent=11 // pred_region
          %s343 = ssub.s32 256, 256
          %344 = vsyncadd [#allocation9], %s343
          %s345 = smul.addr %s35, 4
          %s346 = smul.addr %s345, 64
          %s347 = scalar_lea.hbm %s3, %s346
          %s348 = sshll.u32 [#allocation8], 4
          %s349 = int_to_ptr.vmem [resolvable:$true] %s348
          %354 = dma.hbm_to_vmem [thread:$0]  %s347, 256, %s349, [#allocation9], 64, 64, 4
        $region24: #{tpu_custom_call.1} parent=11 // pred_fallthru
          _
        // Predicated region
        $region25: #{tpu_custom_call.1} parent=11 // pred_check
          %p355 = pneg %p167
        $region26: #{tpu_custom_call.1} parent=11 // pred_check_branch
          %357 = sbr.rel (%p355) target = $region28
        $region27: #{tpu_custom_call.1} parent=11 // pred_region
          %s359 = ssub.s32 16, 16
          %360 = vsyncadd [#allocation9], %s359
          %s361 = smul.addr %s35, 16
          %s362 = scalar_lea.hbm %s4, %s361
          %s364 = sshll.u32 [#allocation10], 4
          %s365 = int_to_ptr.vmem [resolvable:$true] %s364
          %367 = dma.hbm_to_vmem [thread:$0]  %s362, 16, %s365, [#allocation9]
        $region28: #{tpu_custom_call.1} parent=11 // pred_fallthru
          _
        // Predicated region
        $region29: #{tpu_custom_call.1} parent=11 // pred_check
          %p368 = pneg %p193
        $region30: #{tpu_custom_call.1} parent=11 // pred_check_branch
          %370 = sbr.rel (%p368) target = $region32
        $region31: #{tpu_custom_call.1} parent=11 // pred_region
          %s372 = ssub.s32 16, 16
          %373 = vsyncadd [#allocation12], %s372
          %s374 = smul.addr %s35, 16
          %s375 = scalar_lea.hbm %s5, %s374
          %s377 = sshll.u32 [#allocation11], 4
          %s378 = int_to_ptr.vmem [resolvable:$true] %s377
          %380 = dma.hbm_to_vmem [thread:$0]  %s375, 16, %s378, [#allocation12]
        $region32: #{tpu_custom_call.1} parent=11 // pred_fallthru
          _
        // Predicated region
        $region33: #{tpu_custom_call.1} parent=11 // pred_check
          %p381 = pneg %p219
        $region34: #{tpu_custom_call.1} parent=11 // pred_check_branch
          %383 = sbr.rel (%p381) target = $region36
        $region35: #{tpu_custom_call.1} parent=11 // pred_region
          %s385 = ssub.s32 16, 16
          %386 = vsyncadd [#allocation12], %s385
          %s387 = smul.addr %s35, 16
          %s388 = scalar_lea.hbm %s6, %s387
          %s390 = sshll.u32 [#allocation13], 4
          %s391 = int_to_ptr.vmem [resolvable:$true] %s390
          %393 = dma.hbm_to_vmem [thread:$0]  %s388, 16, %s391, [#allocation12]
        $region36: #{tpu_custom_call.1} parent=11 // pred_fallthru
          _
        // Predicated region
        $region37: #{tpu_custom_call.1} parent=11 // pred_check
          %p394 = pneg %p245
        $region38: #{tpu_custom_call.1} parent=11 // pred_check_branch
          %396 = sbr.rel (%p394) target = $region40
        $region39: #{tpu_custom_call.1} parent=11 // pred_region
          %s398 = ssub.s32 256, 256
          %399 = vsyncadd [#allocation15], %s398
          %s400 = smul.addr %s35, 4
          %s401 = smul.addr %s400, 64
          %s402 = scalar_lea.hbm %s7, %s401
          %s403 = sshll.u32 [#allocation14], 4
          %s404 = int_to_ptr.vmem [resolvable:$true] %s403
          %409 = dma.hbm_to_vmem [thread:$0]  %s402, 256, %s404, [#allocation15], 64, 64, 4
        $region40: #{tpu_custom_call.1} parent=11 // pred_fallthru
          _
        // Predicated region
        $region41: #{tpu_custom_call.1} parent=11 // pred_check
          %p410 = pneg %p266
        $region42: #{tpu_custom_call.1} parent=11 // pred_check_branch
          %412 = sbr.rel (%p410) target = $region44
        $region43: #{tpu_custom_call.1} parent=11 // pred_region
          %s414 = ssub.s32 16, 16
          %415 = vsyncadd [#allocation15], %s414
          %s417 = sshll.u32 [#allocation16], 4
          %s418 = int_to_ptr.vmem [resolvable:$true] %s417
          %420 = dma.hbm_to_vmem [thread:$0]  %s8, 16, %s418, [#allocation15]
        $region44: #{tpu_custom_call.1} parent=11 // pred_fallthru
          _
      $region12: #{tpu_custom_call.1} parent=5 // pred_fallthru
        _
      %p421 = scmp.lt.s32.totalorder %s25, 2
      // Predicated region
      $region45: #{tpu_custom_call.1} parent=5 // pred_check
        %p422 = pneg %p421
      $region46: #{tpu_custom_call.1} parent=5 // pred_check_branch
        %424 = sbr.rel (%p422) target = $region48
      $region47: #{tpu_custom_call.1} parent=5 // pred_region
        // Predicated region
        $region49: #{tpu_custom_call.1} parent=47 // pred_check
          %p425 = pneg %p57
        $region50: #{tpu_custom_call.1} parent=47 // pred_check_branch
          %427 = sbr.rel (%p425) target = $region52
        $region51: #{tpu_custom_call.1} parent=47 // pred_region
          %s428 = sand.u32 %s47, 1
          %s429 = scalar_lea.sflag [#allocation3], %s428
          %s430 = sand.u32 %s47, 1
          %s431 = smul.addr %s430, 4
          %s432 = scalar_lea.vmem [#allocation2], %s431
          %s434 = ssub.s32 64, 64
          %435 = vsyncadd %s429, %s434
          %s436 = smul.addr %s32, 64
          %s437 = scalar_lea.hbm %s0, %s436
          %s439 = sshll.u32 %s432, 4
          %s440 = int_to_ptr.vmem [resolvable:$true] %s439
          %442 = dma.hbm_to_vmem [thread:$0]  %s437, 64, %s440, %s429
        $region52: #{tpu_custom_call.1} parent=47 // pred_fallthru
          _
      $region48: #{tpu_custom_call.1} parent=5 // pred_fallthru
        _
      %p443 = scmp.le.s32.totalorder 1, %s25
      %p444 = scmp.lt.s32.totalorder %s25, 3
      %p445 = pnand %p443, %p444
      %p446 = pneg %p445
      // Predicated region
      $region53: #{tpu_custom_call.1} parent=5 // pred_check
        _
      $region54: #{tpu_custom_call.1} parent=5 // pred_check_branch
        %448 = sbr.rel (%p445) target = $region56
      $region55: #{tpu_custom_call.1} parent=5 // pred_region
        %s449 = ssub.s32 %s25, 1
        %s450 = sand.u32 %s50, 1
        %s451 = scalar_lea.sflag [#allocation3], %s450
        %s452 = sand.u32 %s50, 1
        %s453 = smul.addr %s452, 4
        %s454 = scalar_lea.vmem [#allocation2], %s453
        // Predicated region
        $region57: #{tpu_custom_call.1} parent=55 // pred_check
          %p455 = pneg %p63
        $region58: #{tpu_custom_call.1} parent=55 // pred_check_branch
          %457 = sbr.rel (%p455) target = $region60
        $region59: #{tpu_custom_call.1} parent=55 // pred_region
          %458 = dma.done %s451, 64
        $region60: #{tpu_custom_call.1} parent=55 // pred_fallthru
          _
        // Predicated region
        $region61: #{tpu_custom_call.1} parent=55 // pred_check
          %p459 = pneg %p89
        $region62: #{tpu_custom_call.1} parent=55 // pred_check_branch
          %461 = sbr.rel (%p459) target = $region64
        $region63: #{tpu_custom_call.1} parent=55 // pred_region
          %462 = dma.done [#allocation6], 256
        $region64: #{tpu_custom_call.1} parent=55 // pred_fallthru
          _
        // Predicated region
        $region65: #{tpu_custom_call.1} parent=55 // pred_check
          %p463 = pneg %p115
        $region66: #{tpu_custom_call.1} parent=55 // pred_check_branch
          %465 = sbr.rel (%p463) target = $region68
        $region67: #{tpu_custom_call.1} parent=55 // pred_region
          %466 = dma.done [#allocation6], 256
        $region68: #{tpu_custom_call.1} parent=55 // pred_fallthru
          _
        // Predicated region
        $region69: #{tpu_custom_call.1} parent=55 // pred_check
          %p467 = pneg %p141
        $region70: #{tpu_custom_call.1} parent=55 // pred_check_branch
          %469 = sbr.rel (%p467) target = $region72
        $region71: #{tpu_custom_call.1} parent=55 // pred_region
          %470 = dma.done [#allocation9], 256
        $region72: #{tpu_custom_call.1} parent=55 // pred_fallthru
          _
        // Predicated region
        $region73: #{tpu_custom_call.1} parent=55 // pred_check
          %p471 = pneg %p167
        $region74: #{tpu_custom_call.1} parent=55 // pred_check_branch
          %473 = sbr.rel (%p471) target = $region76
        $region75: #{tpu_custom_call.1} parent=55 // pred_region
          %474 = dma.done [#allocation9], 16
        $region76: #{tpu_custom_call.1} parent=55 // pred_fallthru
          _
        // Predicated region
        $region77: #{tpu_custom_call.1} parent=55 // pred_check
          %p475 = pneg %p193
        $region78: #{tpu_custom_call.1} parent=55 // pred_check_branch
          %477 = sbr.rel (%p475) target = $region80
        $region79: #{tpu_custom_call.1} parent=55 // pred_region
          %478 = dma.done [#allocation12], 16
        $region80: #{tpu_custom_call.1} parent=55 // pred_fallthru
          _
        // Predicated region
        $region81: #{tpu_custom_call.1} parent=55 // pred_check
          %p479 = pneg %p219
        $region82: #{tpu_custom_call.1} parent=55 // pred_check_branch
          %481 = sbr.rel (%p479) target = $region84
        $region83: #{tpu_custom_call.1} parent=55 // pred_region
          %482 = dma.done [#allocation12], 16
        $region84: #{tpu_custom_call.1} parent=55 // pred_fallthru
          _
        // Predicated region
        $region85: #{tpu_custom_call.1} parent=55 // pred_check
          %p483 = pneg %p245
        $region86: #{tpu_custom_call.1} parent=55 // pred_check_branch
          %485 = sbr.rel (%p483) target = $region88
        $region87: #{tpu_custom_call.1} parent=55 // pred_region
          %486 = dma.done [#allocation15], 256
        $region88: #{tpu_custom_call.1} parent=55 // pred_fallthru
          _
        // Predicated region
        $region89: #{tpu_custom_call.1} parent=55 // pred_check
          %p487 = pneg %p266
        $region90: #{tpu_custom_call.1} parent=55 // pred_check_branch
          %489 = sbr.rel (%p487) target = $region92
        $region91: #{tpu_custom_call.1} parent=55 // pred_region
          %490 = dma.done [#allocation15], 16
        $region92: #{tpu_custom_call.1} parent=55 // pred_fallthru
          _
        %s491 = sand.u32 %s50, 1
        %s492 = scalar_lea.sflag [#allocation3], %s491
        %s493 = sand.u32 %s50, 1
        %s494 = smul.addr %s493, 4
        %s495 = scalar_lea.vmem [#allocation2], %s494
        %p496 = pneg %p63
        %p497 = pneg %p60
        %p498 = pneg %p89
        %p499 = pneg %p86
        %p500 = pneg %p115
        %p501 = pneg %p112
        %p502 = pneg %p141
        %p503 = pneg %p138
        %p504 = pneg %p167
        %p505 = pneg %p164
        %p506 = pneg %p193
        %p507 = pneg %p190
        %p508 = pneg %p219
        %p509 = pneg %p216
        %p510 = pneg %p245
        %p511 = pneg %p242
        %p512 = pneg %p266
        %p513 = pneg %p263
        %p514 = pneg %p292
        %p515 = pneg %p289
        %s516 = sand.u32 %s279, 1
        %s517 = scalar_lea.sflag [#allocation4], %s516
        %s518 = sand.u32 %s279, 1
        %s519 = smul.addr %s518, 8
        %s520 = scalar_lea.vmem [#allocation17], %s519
        %v522 = vld [vmem:[%s454] sm:$0xf]
        %v523 = vld [vmem:[#allocation5] sm:$0xf]
        %v524 = vld [vmem:[#allocation5 + $0x4] sm:$0xf]
        %v525 = vld [vmem:[#allocation5 + $0x8] sm:$0xf]
        %v526 = vld [vmem:[#allocation5 + $0xc] sm:$0xf]
        %v527 = vld [vmem:[#allocation10] sm:$0x1]
        %v529 = vlaneseq
        %v530 = vshrl.u32 %v529, 7
        %v531 = vsub.s32 0, %v530
        %v532 = vrot.slane %v527, %v531
        %v538 = vunpack.c.l.b16 %v523
        %v539 = vunpack.c.l.b16 %v524
        %v540 = vunpack.c.l.b16 %v525
        %v541 = vunpack.c.l.b16 %v526
        %v542 = vpack.c.b16 %v539, %v538
        %v543 = vpack.c.b16 %v541, %v540
        %vm546 = vcmask 261120
        %v548 = vsel %vm546, %v522, 0
        %550 = vmatprep.subr.bf16.mxu0 0
        %551 = vmatpush1.bf16.msra.mxu0 %v542
        %552 = vmatprep.subr.bf16.mxu0 0
        %553 = vmatpush1.bf16.msra.mxu0 %v543
        %554 = vmatprep.subr.bf16.mxu0 0
        %555 = vmatpush1.bf16.msra.mxu0 0
        %556 = vmatprep.subr.bf16.mxu0 0
        %557 = vmatpush1.bf16.msra.mxu0 0
        %558 = vmatprep.subr.bf16.mxu0 0
        %559 = vmatpush1.bf16.msra.mxu0 0
        %560 = vmatprep.subr.bf16.mxu0 0
        %561 = vmatpush1.bf16.msra.mxu0 0
        %562 = vmatprep.subr.bf16.mxu0 0
        %563 = vmatpush1.bf16.msra.mxu0 0
        %564 = vmatprep.subr.bf16.mxu0 0
        %565 = vmatpush1.bf16.msra.mxu0 0
        %566 = vmatprep.subr.bf16.mxu0 0
        %567 = vmatpush1.bf16.msra.mxu0 0
        %568 = vmatprep.subr.bf16.mxu0 0
        %569 = vmatpush1.bf16.msra.mxu0 0
        %570 = vmatprep.subr.bf16.mxu0 0
        %571 = vmatpush1.bf16.msra.mxu0 0
        %572 = vmatprep.subr.bf16.mxu0 0
        %573 = vmatpush1.bf16.msra.mxu0 0
        %574 = vmatprep.subr.bf16.mxu0 0
        %575 = vmatpush1.bf16.msra.mxu0 0
        %576 = vmatprep.subr.bf16.mxu0 0
        %577 = vmatpush1.bf16.msra.mxu0 0
        %578 = vmatprep.subr.bf16.mxu0 0
        %579 = vmatpush1.bf16.msra.mxu0 0
        %580 = vmatprep.subr.bf16.mxu0 0
        %581 = vmatpush1.bf16.msra.mxu0 0
        %582 = vmatprep.mubr.bf16.mxu0 0
        %583 = vmatmul.mubr.bf16.gmra.mrb[0].mxu0 %v548
        %v584 = vpop.f32.mrb[0].mxu0
        %v585 = vadd.f32 %v532, %v584
        %v586 = vpop.f32.mrb[0].mxu0
        %v587 = vpop.f32.mrb[0].mxu0
        %v588 = vpop.f32.mrb[0].mxu0
        %589 = vdwg.mxu0
        %v590 = vpack.c.bf16 %v585, %v585
        %v591 = vld [vmem:[#allocation7] sm:$0xf]
        %v592 = vld [vmem:[#allocation7 + $0x4] sm:$0xf]
        %v593 = vld [vmem:[#allocation7 + $0x8] sm:$0xf]
        %v594 = vld [vmem:[#allocation7 + $0xc] sm:$0xf]
        %v595 = vld [vmem:[#allocation11] sm:$0x1]
        %v597 = vlaneseq
        %v598 = vshrl.u32 %v597, 7
        %v599 = vsub.s32 0, %v598
        %v600 = vrot.slane %v595, %v599
        %v606 = vunpack.c.l.b16 %v591
        %v607 = vunpack.c.l.b16 %v592
        %v608 = vunpack.c.l.b16 %v593
        %v609 = vunpack.c.l.b16 %v594
        %v610 = vpack.c.b16 %v607, %v606
        %v611 = vpack.c.b16 %v609, %v608
        %614 = vmatprep.subr.bf16.mxu0 0
        %615 = vmatpush1.bf16.msra.mxu0 %v610
        %616 = vmatprep.subr.bf16.mxu0 0
        %617 = vmatpush1.bf16.msra.mxu0 %v611
        %618 = vmatprep.subr.bf16.mxu0 0
        %619 = vmatpush1.bf16.msra.mxu0 0
        %620 = vmatprep.subr.bf16.mxu0 0
        %621 = vmatpush1.bf16.msra.mxu0 0
        %622 = vmatprep.subr.bf16.mxu0 0
        %623 = vmatpush1.bf16.msra.mxu0 0
        %624 = vmatprep.subr.bf16.mxu0 0
        %625 = vmatpush1.bf16.msra.mxu0 0
        %626 = vmatprep.subr.bf16.mxu0 0
        %627 = vmatpush1.bf16.msra.mxu0 0
        %628 = vmatprep.subr.bf16.mxu0 0
        %629 = vmatpush1.bf16.msra.mxu0 0
        %630 = vmatprep.subr.bf16.mxu0 0
        %631 = vmatpush1.bf16.msra.mxu0 0
        %632 = vmatprep.subr.bf16.mxu0 0
        %633 = vmatpush1.bf16.msra.mxu0 0
        %634 = vmatprep.subr.bf16.mxu0 0
        %635 = vmatpush1.bf16.msra.mxu0 0
        %636 = vmatprep.subr.bf16.mxu0 0
        %637 = vmatpush1.bf16.msra.mxu0 0
        %638 = vmatprep.subr.bf16.mxu0 0
        %639 = vmatpush1.bf16.msra.mxu0 0
        %640 = vmatprep.subr.bf16.mxu0 0
        %641 = vmatpush1.bf16.msra.mxu0 0
        %642 = vmatprep.subr.bf16.mxu0 0
        %643 = vmatpush1.bf16.msra.mxu0 0
        %644 = vmatprep.subr.bf16.mxu0 0
        %645 = vmatpush1.bf16.msra.mxu0 0
        %646 = vmatprep.mubr.bf16.mxu0 0
        %647 = vmatmul.mubr.bf16.gmra.mrb[0].mxu0 %v548
        %v648 = vpop.f32.mrb[0].mxu0
        %v649 = vadd.f32 %v600, %v648
        %v650 = vpop.f32.mrb[0].mxu0
        %v651 = vpop.f32.mrb[0].mxu0
        %v652 = vpop.f32.mrb[0].mxu0
        %653 = vdwg.mxu0
        %v654 = vpack.c.bf16 %v649, %v649
        %v655 = vld [vmem:[#allocation8] sm:$0xf]
        %v656 = vld [vmem:[#allocation8 + $0x4] sm:$0xf]
        %v657 = vld [vmem:[#allocation8 + $0x8] sm:$0xf]
        %v658 = vld [vmem:[#allocation8 + $0xc] sm:$0xf]
        %v659 = vld [vmem:[#allocation13] sm:$0x1]
        %v661 = vlaneseq
        %v662 = vshrl.u32 %v661, 7
        %v663 = vsub.s32 0, %v662
        %v664 = vrot.slane %v659, %v663
        %v670 = vunpack.c.l.b16 %v655
        %v671 = vunpack.c.l.b16 %v656
        %v672 = vunpack.c.l.b16 %v657
        %v673 = vunpack.c.l.b16 %v658
        %v674 = vpack.c.b16 %v671, %v670
        %v675 = vpack.c.b16 %v673, %v672
        %678 = vmatprep.subr.bf16.mxu0 0
        %679 = vmatpush1.bf16.msra.mxu0 %v674
        %680 = vmatprep.subr.bf16.mxu0 0
        %681 = vmatpush1.bf16.msra.mxu0 %v675
        %682 = vmatprep.subr.bf16.mxu0 0
        %683 = vmatpush1.bf16.msra.mxu0 0
        %684 = vmatprep.subr.bf16.mxu0 0
        %685 = vmatpush1.bf16.msra.mxu0 0
        %686 = vmatprep.subr.bf16.mxu0 0
        %687 = vmatpush1.bf16.msra.mxu0 0
        %688 = vmatprep.subr.bf16.mxu0 0
        %689 = vmatpush1.bf16.msra.mxu0 0
        %690 = vmatprep.subr.bf16.mxu0 0
        %691 = vmatpush1.bf16.msra.mxu0 0
        %692 = vmatprep.subr.bf16.mxu0 0
        %693 = vmatpush1.bf16.msra.mxu0 0
        %694 = vmatprep.subr.bf16.mxu0 0
        %695 = vmatpush1.bf16.msra.mxu0 0
        %696 = vmatprep.subr.bf16.mxu0 0
        %697 = vmatpush1.bf16.msra.mxu0 0
        %698 = vmatprep.subr.bf16.mxu0 0
        %699 = vmatpush1.bf16.msra.mxu0 0
        %700 = vmatprep.subr.bf16.mxu0 0
        %701 = vmatpush1.bf16.msra.mxu0 0
        %702 = vmatprep.subr.bf16.mxu0 0
        %703 = vmatpush1.bf16.msra.mxu0 0
        %704 = vmatprep.subr.bf16.mxu0 0
        %705 = vmatpush1.bf16.msra.mxu0 0
        %706 = vmatprep.subr.bf16.mxu0 0
        %707 = vmatpush1.bf16.msra.mxu0 0
        %708 = vmatprep.subr.bf16.mxu0 0
        %709 = vmatpush1.bf16.msra.mxu0 0
        %710 = vmatprep.mubr.bf16.mxu0 0
        %711 = vmatmul.mubr.bf16.gmra.mrb[0].mxu0 %v548
        %v712 = vpop.f32.mrb[0].mxu0
        %v713 = vadd.f32 %v664, %v712
        %v714 = vpop.f32.mrb[0].mxu0
        %v715 = vpop.f32.mrb[0].mxu0
        %v716 = vpop.f32.mrb[0].mxu0
        %717 = vdwg.mxu0
        %v718 = vpack.c.bf16 %v713, %v713
        %vm719 = vcmask 64512
        %v721 = vsel %vm719, %v590, 0
        %v724 = vsel %vm719, %v654, 0
        %726 = vmatprep.subr.bf16.mxu0 0
        %727 = vmatpush1.bf16.xpose.msra.mxu0 %v724
        %728 = vmatprep.subr.bf16.mxu0 0
        %729 = vmatpush1.bf16.xpose.msra.mxu0 0
        %730 = vmatprep.subr.bf16.mxu0 0
        %731 = vmatpush1.bf16.xpose.msra.mxu0 0
        %732 = vmatprep.subr.bf16.mxu0 0
        %733 = vmatpush1.bf16.xpose.msra.mxu0 0
        %734 = vmatprep.subr.bf16.mxu0 0
        %735 = vmatpush1.bf16.xpose.msra.mxu0 0
        %736 = vmatprep.subr.bf16.mxu0 0
        %737 = vmatpush1.bf16.xpose.msra.mxu0 0
        %738 = vmatprep.subr.bf16.mxu0 0
        %739 = vmatpush1.bf16.xpose.msra.mxu0 0
        %740 = vmatprep.subr.bf16.mxu0 0
        %741 = vmatpush1.bf16.xpose.msra.mxu0 0
        %742 = vmatprep.subr.bf16.mxu0 0
        %743 = vmatpush1.bf16.xpose.msra.mxu0 0
        %744 = vmatprep.subr.bf16.mxu0 0
        %745 = vmatpush1.bf16.xpose.msra.mxu0 0
        %746 = vmatprep.subr.bf16.mxu0 0
        %747 = vmatpush1.bf16.xpose.msra.mxu0 0
        %748 = vmatprep.subr.bf16.mxu0 0
        %749 = vmatpush1.bf16.xpose.msra.mxu0 0
        %750 = vmatprep.subr.bf16.mxu0 0
        %751 = vmatpush1.bf16.xpose.msra.mxu0 0
        %752 = vmatprep.subr.bf16.mxu0 0
        %753 = vmatpush1.bf16.xpose.msra.mxu0 0
        %754 = vmatprep.subr.bf16.mxu0 0
        %755 = vmatpush1.bf16.xpose.msra.mxu0 0
        %756 = vmatprep.subr.bf16.mxu0 0
        %757 = vmatpush1.bf16.xpose.msra.mxu0 0
        %758 = vmatprep.mubr.bf16.mxu0 0
        %759 = vmatmul.mubr.bf16.gmra.mrb[0].mxu0 %v721
        %v760 = vpop.f32.mrb[0].mxu0
        %v761 = vadd.f32 0.0, %v760
        %v762 = vpop.f32.mrb[0].mxu0
        %v763 = vpop.f32.mrb[0].mxu0
        %v764 = vpop.f32.mrb[0].mxu0
        %765 = vdwg.mxu0
        %v766 = vsel %vm719, %v761, -inf
        %767 = vmax.xlane.f32.xlu0 %v766
        %v768 = vpop.xlane.xlu0 %767
        %v769 = vsub.f32 %v761, %v768
        %v770 = vmul.f32 %v769, 1.442695
        %v771 = vpow.pop %v770
        %v772 = vsel %vm719, %v771, 0.0
        %773 = vadd.xlane.f32.xlu0 %v772
        %v774 = vpop.xlane.xlu0 %773
        %v775 = vrcp.pop %v774
        %v776 = vmul.f32 %v771, %v775
        %v777 = vpack.c.bf16 %v776, %v776
        %v779 = vsel %vm719, %v777, 0
        %vm781 = vcmask 1043456
        %v783 = vsel %vm781, %v718, 0
        %785 = vmatprep.subr.bf16.mxu0 0
        %786 = vmatpush1.bf16.msra.mxu0 %v783
        %787 = vmatprep.subr.bf16.mxu0 0
        %788 = vmatpush1.bf16.msra.mxu0 0
        %789 = vmatprep.subr.bf16.mxu0 0
        %790 = vmatpush1.bf16.msra.mxu0 0
        %791 = vmatprep.subr.bf16.mxu0 0
        %792 = vmatpush1.bf16.msra.mxu0 0
        %793 = vmatprep.subr.bf16.mxu0 0
        %794 = vmatpush1.bf16.msra.mxu0 0
        %795 = vmatprep.subr.bf16.mxu0 0
        %796 = vmatpush1.bf16.msra.mxu0 0
        %797 = vmatprep.subr.bf16.mxu0 0
        %798 = vmatpush1.bf16.msra.mxu0 0
        %799 = vmatprep.subr.bf16.mxu0 0
        %800 = vmatpush1.bf16.msra.mxu0 0
        %801 = vmatprep.subr.bf16.mxu0 0
        %802 = vmatpush1.bf16.msra.mxu0 0
        %803 = vmatprep.subr.bf16.mxu0 0
        %804 = vmatpush1.bf16.msra.mxu0 0
        %805 = vmatprep.subr.bf16.mxu0 0
        %806 = vmatpush1.bf16.msra.mxu0 0
        %807 = vmatprep.subr.bf16.mxu0 0
        %808 = vmatpush1.bf16.msra.mxu0 0
        %809 = vmatprep.subr.bf16.mxu0 0
        %810 = vmatpush1.bf16.msra.mxu0 0
        %811 = vmatprep.subr.bf16.mxu0 0
        %812 = vmatpush1.bf16.msra.mxu0 0
        %813 = vmatprep.subr.bf16.mxu0 0
        %814 = vmatpush1.bf16.msra.mxu0 0
        %815 = vmatprep.subr.bf16.mxu0 0
        %816 = vmatpush1.bf16.msra.mxu0 0
        %817 = vmatprep.mubr.bf16.mxu0 0
        %818 = vmatmul.mubr.bf16.gmra.mrb[0].mxu0 %v779
        %v819 = vpop.f32.mrb[0].mxu0
        %v820 = vadd.f32 0.0, %v819
        %v821 = vpop.f32.mrb[0].mxu0
        %v822 = vpop.f32.mrb[0].mxu0
        %v823 = vpop.f32.mrb[0].mxu0
        %824 = vdwg.mxu0
        %826 = vrot.lane.b32.xlu0 %v590, 120
        %v827 = vpop.permute.xlu0 %826
        %829 = vrot.lane.b32.xlu0 %v654, 120
        %v830 = vpop.permute.xlu0 %829
        %v832 = vsel %vm719, %v827, 0
        %v835 = vsel %vm719, %v830, 0
        %837 = vmatprep.subr.bf16.mxu0 0
        %838 = vmatpush1.bf16.xpose.msra.mxu0 %v835
        %839 = vmatprep.subr.bf16.mxu0 0
        %840 = vmatpush1.bf16.xpose.msra.mxu0 0
        %841 = vmatprep.subr.bf16.mxu0 0
        %842 = vmatpush1.bf16.xpose.msra.mxu0 0
        %843 = vmatprep.subr.bf16.mxu0 0
        %844 = vmatpush1.bf16.xpose.msra.mxu0 0
        %845 = vmatprep.subr.bf16.mxu0 0
        %846 = vmatpush1.bf16.xpose.msra.mxu0 0
        %847 = vmatprep.subr.bf16.mxu0 0
        %848 = vmatpush1.bf16.xpose.msra.mxu0 0
        %849 = vmatprep.subr.bf16.mxu0 0
        %850 = vmatpush1.bf16.xpose.msra.mxu0 0
        %851 = vmatprep.subr.bf16.mxu0 0
        %852 = vmatpush1.bf16.xpose.msra.mxu0 0
        %853 = vmatprep.subr.bf16.mxu0 0
        %854 = vmatpush1.bf16.xpose.msra.mxu0 0
        %855 = vmatprep.subr.bf16.mxu0 0
        %856 = vmatpush1.bf16.xpose.msra.mxu0 0
        %857 = vmatprep.subr.bf16.mxu0 0
        %858 = vmatpush1.bf16.xpose.msra.mxu0 0
        %859 = vmatprep.subr.bf16.mxu0 0
        %860 = vmatpush1.bf16.xpose.msra.mxu0 0
        %861 = vmatprep.subr.bf16.mxu0 0
        %862 = vmatpush1.bf16.xpose.msra.mxu0 0
        %863 = vmatprep.subr.bf16.mxu0 0
        %864 = vmatpush1.bf16.xpose.msra.mxu0 0
        %865 = vmatprep.subr.bf16.mxu0 0
        %866 = vmatpush1.bf16.xpose.msra.mxu0 0
        %867 = vmatprep.subr.bf16.mxu0 0
        %868 = vmatpush1.bf16.xpose.msra.mxu0 0
        %869 = vmatprep.mubr.bf16.mxu0 0
        %870 = vmatmul.mubr.bf16.gmra.mrb[0].mxu0 %v832
        %v871 = vpop.f32.mrb[0].mxu0
        %v872 = vadd.f32 0.0, %v871
        %v873 = vpop.f32.mrb[0].mxu0
        %v874 = vpop.f32.mrb[0].mxu0
        %v875 = vpop.f32.mrb[0].mxu0
        %876 = vdwg.mxu0
        %v877 = vsel %vm719, %v872, -inf
        %878 = vmax.xlane.f32.xlu0 %v877
        %v879 = vpop.xlane.xlu0 %878
        %v880 = vsub.f32 %v872, %v879
        %v881 = vmul.f32 %v880, 1.442695
        %v882 = vpow.pop %v881
        %v883 = vsel %vm719, %v882, 0.0
        %884 = vadd.xlane.f32.xlu0 %v883
        %v885 = vpop.xlane.xlu0 %884
        %v886 = vrcp.pop %v885
        %v887 = vmul.f32 %v882, %v886
        %v888 = vpack.c.bf16 %v887, %v887
        %890 = vrot.lane.b32.xlu0 %v718, 120
        %v891 = vpop.permute.xlu0 %890
        %v893 = vsel %vm719, %v888, 0
        %v896 = vsel %vm781, %v891, 0
        %898 = vmatprep.subr.bf16.mxu0 0
        %899 = vmatpush1.bf16.msra.mxu0 %v896
        %900 = vmatprep.subr.bf16.mxu0 0
        %901 = vmatpush1.bf16.msra.mxu0 0
        %902 = vmatprep.subr.bf16.mxu0 0
        %903 = vmatpush1.bf16.msra.mxu0 0
        %904 = vmatprep.subr.bf16.mxu0 0
        %905 = vmatpush1.bf16.msra.mxu0 0
        %906 = vmatprep.subr.bf16.mxu0 0
        %907 = vmatpush1.bf16.msra.mxu0 0
        %908 = vmatprep.subr.bf16.mxu0 0
        %909 = vmatpush1.bf16.msra.mxu0 0
        %910 = vmatprep.subr.bf16.mxu0 0
        %911 = vmatpush1.bf16.msra.mxu0 0
        %912 = vmatprep.subr.bf16.mxu0 0
        %913 = vmatpush1.bf16.msra.mxu0 0
        %914 = vmatprep.subr.bf16.mxu0 0
        %915 = vmatpush1.bf16.msra.mxu0 0
        %916 = vmatprep.subr.bf16.mxu0 0
        %917 = vmatpush1.bf16.msra.mxu0 0
        %918 = vmatprep.subr.bf16.mxu0 0
        %919 = vmatpush1.bf16.msra.mxu0 0
        %920 = vmatprep.subr.bf16.mxu0 0
        %921 = vmatpush1.bf16.msra.mxu0 0
        %922 = vmatprep.subr.bf16.mxu0 0
        %923 = vmatpush1.bf16.msra.mxu0 0
        %924 = vmatprep.subr.bf16.mxu0 0
        %925 = vmatpush1.bf16.msra.mxu0 0
        %926 = vmatprep.subr.bf16.mxu0 0
        %927 = vmatpush1.bf16.msra.mxu0 0
        %928 = vmatprep.subr.bf16.mxu0 0
        %929 = vmatpush1.bf16.msra.mxu0 0
        %930 = vmatprep.mubr.bf16.mxu0 0
        %931 = vmatmul.mubr.bf16.gmra.mrb[0].mxu0 %v893
        %v932 = vpop.f32.mrb[0].mxu0
        %v933 = vadd.f32 0.0, %v932
        %v934 = vpop.f32.mrb[0].mxu0
        %v935 = vpop.f32.mrb[0].mxu0
        %v936 = vpop.f32.mrb[0].mxu0
        %937 = vdwg.mxu0
        %938 = vrot.lane.b32.xlu0 %v590, 112
        %v939 = vpop.permute.xlu0 %938
        %940 = vrot.lane.b32.xlu0 %v654, 112
        %v941 = vpop.permute.xlu0 %940
        %v943 = vsel %vm719, %v939, 0
        %v946 = vsel %vm719, %v941, 0
        %948 = vmatprep.subr.bf16.mxu0 0
        %949 = vmatpush1.bf16.xpose.msra.mxu0 %v946
        %950 = vmatprep.subr.bf16.mxu0 0
        %951 = vmatpush1.bf16.xpose.msra.mxu0 0
        %952 = vmatprep.subr.bf16.mxu0 0
        %953 = vmatpush1.bf16.xpose.msra.mxu0 0
        %954 = vmatprep.subr.bf16.mxu0 0
        %955 = vmatpush1.bf16.xpose.msra.mxu0 0
        %956 = vmatprep.subr.bf16.mxu0 0
        %957 = vmatpush1.bf16.xpose.msra.mxu0 0
        %958 = vmatprep.subr.bf16.mxu0 0
        %959 = vmatpush1.bf16.xpose.msra.mxu0 0
        %960 = vmatprep.subr.bf16.mxu0 0
        %961 = vmatpush1.bf16.xpose.msra.mxu0 0
        %962 = vmatprep.subr.bf16.mxu0 0
        %963 = vmatpush1.bf16.xpose.msra.mxu0 0
        %964 = vmatprep.subr.bf16.mxu0 0
        %965 = vmatpush1.bf16.xpose.msra.mxu0 0
        %966 = vmatprep.subr.bf16.mxu0 0
        %967 = vmatpush1.bf16.xpose.msra.mxu0 0
        %968 = vmatprep.subr.bf16.mxu0 0
        %969 = vmatpush1.bf16.xpose.msra.mxu0 0
        %970 = vmatprep.subr.bf16.mxu0 0
        %971 = vmatpush1.bf16.xpose.msra.mxu0 0
        %972 = vmatprep.subr.bf16.mxu0 0
        %973 = vmatpush1.bf16.xpose.msra.mxu0 0
        %974 = vmatprep.subr.bf16.mxu0 0
        %975 = vmatpush1.bf16.xpose.msra.mxu0 0
        %976 = vmatprep.subr.bf16.mxu0 0
        %977 = vmatpush1.bf16.xpose.msra.mxu0 0
        %978 = vmatprep.subr.bf16.mxu0 0
        %979 = vmatpush1.bf16.xpose.msra.mxu0 0
        %980 = vmatprep.mubr.bf16.mxu0 0
        %981 = vmatmul.mubr.bf16.gmra.mrb[0].mxu0 %v943
        %v982 = vpop.f32.mrb[0].mxu0
        %v983 = vadd.f32 0.0, %v982
        %v984 = vpop.f32.mrb[0].mxu0
        %v985 = vpop.f32.mrb[0].mxu0
        %v986 = vpop.f32.mrb[0].mxu0
        %987 = vdwg.mxu0
        %v988 = vsel %vm719, %v983, -inf
        %989 = vmax.xlane.f32.xlu0 %v988
        %v990 = vpop.xlane.xlu0 %989
        %v991 = vsub.f32 %v983, %v990
        %v992 = vmul.f32 %v991, 1.442695
        %v993 = vpow.pop %v992
        %v994 = vsel %vm719, %v993, 0.0
        %995 = vadd.xlane.f32.xlu0 %v994
        %v996 = vpop.xlane.xlu0 %995
        %v997 = vrcp.pop %v996
        %v998 = vmul.f32 %v993, %v997
        %v999 = vpack.c.bf16 %v998, %v998
        %1000 = vrot.lane.b32.xlu0 %v718, 112
        %v1001 = vpop.permute.xlu0 %1000
        %v1003 = vsel %vm719, %v999, 0
        %v1006 = vsel %vm781, %v1001, 0
        %1008 = vmatprep.subr.bf16.mxu0 0
        %1009 = vmatpush1.bf16.msra.mxu0 %v1006
        %1010 = vmatprep.subr.bf16.mxu0 0
        %1011 = vmatpush1.bf16.msra.mxu0 0
        %1012 = vmatprep.subr.bf16.mxu0 0
        %1013 = vmatpush1.bf16.msra.mxu0 0
        %1014 = vmatprep.subr.bf16.mxu0 0
        %1015 = vmatpush1.bf16.msra.mxu0 0
        %1016 = vmatprep.subr.bf16.mxu0 0
        %1017 = vmatpush1.bf16.msra.mxu0 0
        %1018 = vmatprep.subr.bf16.mxu0 0
        %1019 = vmatpush1.bf16.msra.mxu0 0
        %1020 = vmatprep.subr.bf16.mxu0 0
        %1021 = vmatpush1.bf16.msra.mxu0 0
        %1022 = vmatprep.subr.bf16.mxu0 0
        %1023 = vmatpush1.bf16.msra.mxu0 0
        %1024 = vmatprep.subr.bf16.mxu0 0
        %1025 = vmatpush1.bf16.msra.mxu0 0
        %1026 = vmatprep.subr.bf16.mxu0 0
        %1027 = vmatpush1.bf16.msra.mxu0 0
        %1028 = vmatprep.subr.bf16.mxu0 0
        %1029 = vmatpush1.bf16.msra.mxu0 0
        %1030 = vmatprep.subr.bf16.mxu0 0
        %1031 = vmatpush1.bf16.msra.mxu0 0
        %1032 = vmatprep.subr.bf16.mxu0 0
        %1033 = vmatpush1.bf16.msra.mxu0 0
        %1034 = vmatprep.subr.bf16.mxu0 0
        %1035 = vmatpush1.bf16.msra.mxu0 0
        %1036 = vmatprep.subr.bf16.mxu0 0
        %1037 = vmatpush1.bf16.msra.mxu0 0
        %1038 = vmatprep.subr.bf16.mxu0 0
        %1039 = vmatpush1.bf16.msra.mxu0 0
        %1040 = vmatprep.mubr.bf16.mxu0 0
        %1041 = vmatmul.mubr.bf16.gmra.mrb[0].mxu0 %v1003
        %v1042 = vpop.f32.mrb[0].mxu0
        %v1043 = vadd.f32 0.0, %v1042
        %v1044 = vpop.f32.mrb[0].mxu0
        %v1045 = vpop.f32.mrb[0].mxu0
        %v1046 = vpop.f32.mrb[0].mxu0
        %1047 = vdwg.mxu0
        %1048 = vrot.lane.b32.xlu0 %v590, 104
        %v1049 = vpop.permute.xlu0 %1048
        %1050 = vrot.lane.b32.xlu0 %v654, 104
        %v1051 = vpop.permute.xlu0 %1050
        %v1053 = vsel %vm719, %v1049, 0
        %v1056 = vsel %vm719, %v1051, 0
        %1058 = vmatprep.subr.bf16.mxu0 0
        %1059 = vmatpush1.bf16.xpose.msra.mxu0 %v1056
        %1060 = vmatprep.subr.bf16.mxu0 0
        %1061 = vmatpush1.bf16.xpose.msra.mxu0 0
        %1062 = vmatprep.subr.bf16.mxu0 0
        %1063 = vmatpush1.bf16.xpose.msra.mxu0 0
        %1064 = vmatprep.subr.bf16.mxu0 0
        %1065 = vmatpush1.bf16.xpose.msra.mxu0 0
        %1066 = vmatprep.subr.bf16.mxu0 0
        %1067 = vmatpush1.bf16.xpose.msra.mxu0 0
        %1068 = vmatprep.subr.bf16.mxu0 0
        %1069 = vmatpush1.bf16.xpose.msra.mxu0 0
        %1070 = vmatprep.subr.bf16.mxu0 0
        %1071 = vmatpush1.bf16.xpose.msra.mxu0 0
        %1072 = vmatprep.subr.bf16.mxu0 0
        %1073 = vmatpush1.bf16.xpose.msra.mxu0 0
        %1074 = vmatprep.subr.bf16.mxu0 0
        %1075 = vmatpush1.bf16.xpose.msra.mxu0 0
        %1076 = vmatprep.subr.bf16.mxu0 0
        %1077 = vmatpush1.bf16.xpose.msra.mxu0 0
        %1078 = vmatprep.subr.bf16.mxu0 0
        %1079 = vmatpush1.bf16.xpose.msra.mxu0 0
        %1080 = vmatprep.subr.bf16.mxu0 0
        %1081 = vmatpush1.bf16.xpose.msra.mxu0 0
        %1082 = vmatprep.subr.bf16.mxu0 0
        %1083 = vmatpush1.bf16.xpose.msra.mxu0 0
        %1084 = vmatprep.subr.bf16.mxu0 0
        %1085 = vmatpush1.bf16.xpose.msra.mxu0 0
        %1086 = vmatprep.subr.bf16.mxu0 0
        %1087 = vmatpush1.bf16.xpose.msra.mxu0 0
        %1088 = vmatprep.subr.bf16.mxu0 0
        %1089 = vmatpush1.bf16.xpose.msra.mxu0 0
        %1090 = vmatprep.mubr.bf16.mxu0 0
        %1091 = vmatmul.mubr.bf16.gmra.mrb[0].mxu0 %v1053
        %v1092 = vpop.f32.mrb[0].mxu0
        %v1093 = vadd.f32 0.0, %v1092
        %v1094 = vpop.f32.mrb[0].mxu0
        %v1095 = vpop.f32.mrb[0].mxu0
        %v1096 = vpop.f32.mrb[0].mxu0
        %1097 = vdwg.mxu0
        %v1098 = vsel %vm719, %v1093, -inf
        %1099 = vmax.xlane.f32.xlu0 %v1098
        %v1100 = vpop.xlane.xlu0 %1099
        %v1101 = vsub.f32 %v1093, %v1100
        %v1102 = vmul.f32 %v1101, 1.442695
        %v1103 = vpow.pop %v1102
        %v1104 = vsel %vm719, %v1103, 0.0
        %1105 = vadd.xlane.f32.xlu0 %v1104
        %v1106 = vpop.xlane.xlu0 %1105
        %v1107 = vrcp.pop %v1106
        %v1108 = vmul.f32 %v1103, %v1107
        %v1109 = vpack.c.bf16 %v1108, %v1108
        %1110 = vrot.lane.b32.xlu0 %v718, 104
        %v1111 = vpop.permute.xlu0 %1110
        %v1113 = vsel %vm719, %v1109, 0
        %v1116 = vsel %vm781, %v1111, 0
        %1118 = vmatprep.subr.bf16.mxu0 0
        %1119 = vmatpush1.bf16.msra.mxu0 %v1116
        %1120 = vmatprep.subr.bf16.mxu0 0
        %1121 = vmatpush1.bf16.msra.mxu0 0
        %1122 = vmatprep.subr.bf16.mxu0 0
        %1123 = vmatpush1.bf16.msra.mxu0 0
        %1124 = vmatprep.subr.bf16.mxu0 0
        %1125 = vmatpush1.bf16.msra.mxu0 0
        %1126 = vmatprep.subr.bf16.mxu0 0
        %1127 = vmatpush1.bf16.msra.mxu0 0
        %1128 = vmatprep.subr.bf16.mxu0 0
        %1129 = vmatpush1.bf16.msra.mxu0 0
        %1130 = vmatprep.subr.bf16.mxu0 0
        %1131 = vmatpush1.bf16.msra.mxu0 0
        %1132 = vmatprep.subr.bf16.mxu0 0
        %1133 = vmatpush1.bf16.msra.mxu0 0
        %1134 = vmatprep.subr.bf16.mxu0 0
        %1135 = vmatpush1.bf16.msra.mxu0 0
        %1136 = vmatprep.subr.bf16.mxu0 0
        %1137 = vmatpush1.bf16.msra.mxu0 0
        %1138 = vmatprep.subr.bf16.mxu0 0
        %1139 = vmatpush1.bf16.msra.mxu0 0
        %1140 = vmatprep.subr.bf16.mxu0 0
        %1141 = vmatpush1.bf16.msra.mxu0 0
        %1142 = vmatprep.subr.bf16.mxu0 0
        %1143 = vmatpush1.bf16.msra.mxu0 0
        %1144 = vmatprep.subr.bf16.mxu0 0
        %1145 = vmatpush1.bf16.msra.mxu0 0
        %1146 = vmatprep.subr.bf16.mxu0 0
        %1147 = vmatpush1.bf16.msra.mxu0 0
        %1148 = vmatprep.subr.bf16.mxu0 0
        %1149 = vmatpush1.bf16.msra.mxu0 0
        %1150 = vmatprep.mubr.bf16.mxu0 0
        %1151 = vmatmul.mubr.bf16.gmra.mrb[0].mxu0 %v1113
        %v1152 = vpop.f32.mrb[0].mxu0
        %v1153 = vadd.f32 0.0, %v1152
        %v1154 = vpop.f32.mrb[0].mxu0
        %v1155 = vpop.f32.mrb[0].mxu0
        %v1156 = vpop.f32.mrb[0].mxu0
        %1157 = vdwg.mxu0
        %1159 = vrot.lane.b32.xlu0 %v933, 8
        %v1160 = vpop.permute.xlu0 %1159
        %1163 = vrot.lane.b32.xlu0 %v1043, 16
        %v1164 = vpop.permute.xlu0 %1163
        %1167 = vrot.lane.b32.xlu0 %v1153, 24
        %v1168 = vpop.permute.xlu0 %1167
        %v1170 = vsel %vm719, %v820, %v1160
        %vm1171 = vcmask 130048
        %v1172 = vsel %vm1171, %v1170, %v1164
        %vm1173 = vcmask 195584
        %v1174 = vsel %vm1173, %v1172, %v1168
        %v1175 = vpack.c.bf16 %v1174, %v1174
        %v1176 = vld [vmem:[#allocation14] sm:$0xf]
        %v1177 = vld [vmem:[#allocation14 + $0x4] sm:$0xf]
        %v1178 = vld [vmem:[#allocation14 + $0x8] sm:$0xf]
        %v1179 = vld [vmem:[#allocation14 + $0xc] sm:$0xf]
        %v1184 = vunpack.c.l.b16 %v1176
        %v1185 = vunpack.c.l.b16 %v1177
        %v1186 = vunpack.c.l.b16 %v1178
        %v1187 = vunpack.c.l.b16 %v1179
        %v1188 = vpack.c.b16 %v1185, %v1184
        %v1189 = vpack.c.b16 %v1187, %v1186
        %v1193 = vsel %vm546, %v1175, 0
        %1195 = vmatprep.subr.bf16.mxu0 0
        %1196 = vmatpush1.bf16.msra.mxu0 %v1188
        %1197 = vmatprep.subr.bf16.mxu0 0
        %1198 = vmatpush1.bf16.msra.mxu0 %v1189
        %1199 = vmatprep.subr.bf16.mxu0 0
        %1200 = vmatpush1.bf16.msra.mxu0 0
        %1201 = vmatprep.subr.bf16.mxu0 0
        %1202 = vmatpush1.bf16.msra.mxu0 0
        %1203 = vmatprep.subr.bf16.mxu0 0
        %1204 = vmatpush1.bf16.msra.mxu0 0
        %1205 = vmatprep.subr.bf16.mxu0 0
        %1206 = vmatpush1.bf16.msra.mxu0 0
        %1207 = vmatprep.subr.bf16.mxu0 0
        %1208 = vmatpush1.bf16.msra.mxu0 0
        %1209 = vmatprep.subr.bf16.mxu0 0
        %1210 = vmatpush1.bf16.msra.mxu0 0
        %1211 = vmatprep.subr.bf16.mxu0 0
        %1212 = vmatpush1.bf16.msra.mxu0 0
        %1213 = vmatprep.subr.bf16.mxu0 0
        %1214 = vmatpush1.bf16.msra.mxu0 0
        %1215 = vmatprep.subr.bf16.mxu0 0
        %1216 = vmatpush1.bf16.msra.mxu0 0
        %1217 = vmatprep.subr.bf16.mxu0 0
        %1218 = vmatpush1.bf16.msra.mxu0 0
        %1219 = vmatprep.subr.bf16.mxu0 0
        %1220 = vmatpush1.bf16.msra.mxu0 0
        %1221 = vmatprep.subr.bf16.mxu0 0
        %1222 = vmatpush1.bf16.msra.mxu0 0
        %1223 = vmatprep.subr.bf16.mxu0 0
        %1224 = vmatpush1.bf16.msra.mxu0 0
        %1225 = vmatprep.subr.bf16.mxu0 0
        %1226 = vmatpush1.bf16.msra.mxu0 0
        %1227 = vmatprep.mubr.bf16.mxu0 0
        %1228 = vmatmul.mubr.bf16.gmra.mrb[0].mxu0 %v1193
        %v1229 = vpop.f32.mrb[0].mxu0
        %v1230 = vadd.f32 0.0, %v1229
        %v1231 = vpop.f32.mrb[0].mxu0
        %v1232 = vpop.f32.mrb[0].mxu0
        %v1233 = vpop.f32.mrb[0].mxu0
        %1234 = vdwg.mxu0
        %p1235 = scmp.eq.s32.totalorder %s35, 0
        // Predicated region
        $region93: #{tpu_custom_call.1} parent=55 // pred_check
          %p1236 = pneg %p1235
        $region94: #{tpu_custom_call.1} parent=55 // pred_check_branch
          %1238 = sbr.rel (%p1236) target = $region96
        $region95: #{tpu_custom_call.1} parent=55 // pred_region
          %v1239 = vld [vmem:[#allocation16] sm:$0x1]
          %v1241 = vlaneseq
          %v1242 = vshrl.u32 %v1241, 7
          %v1243 = vsub.s32 0, %v1242
          %v1244 = vrot.slane %v1239, %v1243
          %1246 = vst.msk [vmem:[%s520] sm:$0xff] %vm546, %v1244
        $region96: #{tpu_custom_call.1} parent=55 // pred_fallthru
          _
        %v1247 = vld [vmem:[%s520] sm:$0xff]
        %v1248 = vadd.f32 %v1247, %v1230
        %1249 = vst.msk [vmem:[%s520] sm:$0xff] %vm546, %v1248
        %s1250 = sand.u32 %s279, 1
        %s1251 = scalar_lea.sflag [#allocation4], %s1250
        %s1252 = sand.u32 %s279, 1
        %s1253 = smul.addr %s1252, 8
        %s1254 = scalar_lea.vmem [#allocation17], %s1253
        // Predicated region
        $region97: #{tpu_custom_call.1} parent=55 // pred_check
          %p1255 = pneg %p289
        $region98: #{tpu_custom_call.1} parent=55 // pred_check_branch
          %1257 = sbr.rel (%p1255) target = $region100
        $region99: #{tpu_custom_call.1} parent=55 // pred_region
          %s1259 = ssub.s32 128, 128
          %1260 = vsyncadd %s1251, %s1259
          %s1261 = smul.addr %s34, 128
          %s1262 = scalar_lea.hbm %s9, %s1261
          %s1264 = sshll.u32 %s1254, 4
          %s1265 = int_to_ptr.vmem [resolvable:$true] %s1264
          %1267 = dma.vmem_to_hbm [thread:$0]  %s1265, 128, %s1262, %s1251
        $region100: #{tpu_custom_call.1} parent=55 // pred_fallthru
          _
      $region56: #{tpu_custom_call.1} parent=5 // pred_fallthru
        _
      %p1268 = scmp.le.s32.totalorder 2, %s25
      // Predicated region
      $region101: #{tpu_custom_call.1} parent=5 // pred_check
        %p1269 = pneg %p1268
      $region102: #{tpu_custom_call.1} parent=5 // pred_check_branch
        %1271 = sbr.rel (%p1269) target = $region104
      $region103: #{tpu_custom_call.1} parent=5 // pred_region
        %s1272 = ssub.s32 %s25, 2
        // Predicated region
        $region105: #{tpu_custom_call.1} parent=103 // pred_check
          %p1273 = pneg %p295
        $region106: #{tpu_custom_call.1} parent=103 // pred_check_branch
          %1275 = sbr.rel (%p1273) target = $region108
        $region107: #{tpu_custom_call.1} parent=103 // pred_region
          %s1276 = sand.u32 %s280, 1
          %s1277 = scalar_lea.sflag [#allocation4], %s1276
          %s1278 = sand.u32 %s280, 1
          %s1279 = smul.addr %s1278, 8
          %s1280 = scalar_lea.vmem [#allocation17], %s1279
          %1281 = dma.done %s1277, 128
        $region108: #{tpu_custom_call.1} parent=103 // pred_fallthru
          _
      $region104: #{tpu_custom_call.1} parent=5 // pred_fallthru
        _
    $region6: #{tpu_custom_call.1} parent=1 // loop_footer
      %s29 = sadd.s32 1, %s25
    $region7: #{tpu_custom_call.1} parent=1 // loop_footer_branch
      %24 = sbr.rel target = $region3
    $region8: #{tpu_custom_call.1} parent=1 // loop_exit
      _
    %1282 = vsyncpa [#allocation3], 1
    %s1283 = scalar_lea.sflag [#allocation3], 1
    %1284 = vsyncpa %s1283, 1
    %1285 = vsyncpa [#allocation6], 1
    %1286 = vsyncpa [#allocation9], 1
    %1287 = vsyncpa [#allocation12], 1
    %1288 = vsyncpa [#allocation15], 1
    %1289 = vsyncpa [#allocation4], 1
    %s1290 = scalar_lea.sflag [#allocation4], 1
    %1291 = vsyncpa %s1290, 1

</llo_original>
